<compile_context>
chip_gen: v6e
topology: v6e:2x2x1
jax: 0.10.0
libtpu: 0.0.40
codegen_flags: <defaults>
</compile_context>

<pallas_src>
import jax
import jax.numpy as jnp
from jax import lax
from jax.experimental import pallas as pl
from jax.experimental.pallas import tpu as pltpu


ENCODED_FEATURE_SIZE = 20  # self.encodedFeatureSize in the module


def _round_up(n, m):
    return -(-n // m) * m


def _slab_layout(F, H):
    """Row offsets of each parameter group inside the packed f32 slab."""
    o_win = 0
    o_whh = o_win + _round_up(F, 8)
    o_wlin = o_whh + _round_up(2 * H, 8)
    o_bias = o_wlin + _round_up(2 * H, 8)
    rows = o_bias + 8
    lanes = _round_up(6 * H, 128)
    return o_win, o_whh, o_wlin, o_bias, rows, lanes


# ---------------------------------------------------------------------------
# Kernel
# ---------------------------------------------------------------------------
def gru_encoder_kernel(x_ref, len_ref, slab_ref, out_ref, gi_ref):
    """Fused bidirectional GRU encoder + output Linear (one batch tile).

    x_ref   : (T, Bt, F)  time-major inputs for this batch tile
    len_ref : (Bt, 1)     int32 sequence lengths (0 for padded rows)
    slab_ref: (rows, 128) packed parameters:
                rows[o_win :o_win+F ]  cols[:6H] = w_in  (dense input proj,
                                                   gate cols [r_f r_b z_f z_b n_f n_b])
                rows[o_whh :o_whh+2H]  cols[:6H] = w_hh  (block-diag recurrent,
                                                   hidden rows [h_f | h_b])
                rows[o_wlin:o_wlin+2H] cols[:H]  = w_lin (output Linear, transposed)
                row  o_bias            cols[:6H] = gi bias (b_ih + b_hh r,z folded)
                row  o_bias+1          cols[:2H] = b_hh n-gate bias
                row  o_bias+2          cols[:H]  = Linear bias
    out_ref : (Bt, H)
    gi_ref  : (T, Bt, 6H) VMEM scratch for the hoisted input projection
    """
    T, Bt, F = x_ref.shape
    H = out_ref.shape[1]
    G = 6 * H
    o_win, o_whh, o_wlin, o_bias, _, _ = _slab_layout(F, H)

    # ---- one-time loads (off the recurrence chain) ----
    w_in = slab_ref[o_win:o_win + F, :G]
    w_hh = slab_ref[o_whh:o_whh + 2 * H, :G]
    w_lin = slab_ref[o_wlin:o_wlin + 2 * H, :H]
    b_in = slab_ref[o_bias:o_bias + 1, :G]
    b_hn = slab_ref[o_bias + 1:o_bias + 2, :2 * H]
    b_lin = slab_ref[o_bias + 2:o_bias + 3, :H]

    lengths = len_ref[...]                                    # (Bt, 1) int32

    # Hoisted input projection: one MXU matmul covers all timesteps. Both
    # directions share the projection of x[t]; the per-step lane select below
    # routes gi[t=i] to the forward gates and gi[t=T-1-i] to the backward ones.
    x2 = x_ref[...].reshape(T * Bt, F)
    gi2 = jnp.dot(x2, w_in, preferred_element_type=jnp.float32) + b_in
    gi_ref[...] = gi2.reshape(T, Bt, G)                       # VMEM scratch

    # ---- loop-invariant masks / broadcasts (hoisted out of the recurrence) ----
    col6 = lax.broadcasted_iota(jnp.int32, (1, G), 1)
    fwd6 = ((col6 < H)
            | ((col6 >= 2 * H) & (col6 < 3 * H))
            | ((col6 >= 4 * H) & (col6 < 5 * H)))   # forward gate columns
    col2 = lax.broadcasted_iota(jnp.int32, (1, 2 * H), 1)
    is_fwd2 = col2 < H                               # stacked hidden [h_f | h_b]
    len_b = jnp.broadcast_to(lengths, (Bt, 2 * H))
    b_hn_b = jnp.broadcast_to(b_hn, (Bt, 2 * H))
    # per-step valid-thresholds; depend only on constants -> off the serial chain
    thr = [jnp.where(is_fwd2, t, T - 1 - t) for t in range(T)]

    h = jnp.zeros((Bt, 2 * H), jnp.float32)                   # [h_fwd | h_bwd]

    # Fully unrolled recurrence (T static & small) for scheduler visibility.
    # TODO(synk): on v5e/v6e, if a bundle dump shows the h @ w_hh MXU push ->
    # MRF-pop round trip on the critical path, replace it with a K=2H
    # broadcast-FMA chain on the VPU (keep the MXU on v7x / large B tiles).
    # TODO(synk): if lane-realign (XLU) from the lane-offset gate slices shows
    # up as binding, pad each gate group to its own 128-lane stripe (N = 3*128).
    for i in range(T):
        gi_f = gi_ref[i]                                      # proj of x[t = i]
        gi_b = gi_ref[T - 1 - i]                              # proj of x[t = T-1-i]
        gi = jnp.where(fwd6, gi_f, gi_b)                      # (Bt, 6H)
        gh = jnp.dot(h, w_hh, preferred_element_type=jnp.float32)   # (Bt, 6H)
        # one packed sigmoid for r|z of both directions: [r_f r_b z_f z_b]
        rz = jax.nn.sigmoid(gi[:, :4 * H] + gh[:, :4 * H])
        r = rz[:, :2 * H]                                     # [r_f | r_b]
        z = rz[:, 2 * H:]                                     # [z_f | z_b]
        n = jnp.tanh(gi[:, 4 * H:] + r * (gh[:, 4 * H:] + b_hn_b))
        h_new = (1.0 - z) * n + z * h
        # forward processes t=i, backward t=T-1-i; freezing h outside the valid
        # range reproduces pack_padded_sequence h_n semantics (padded rows have
        # len=0 and stay at the zero initial state).
        h = jnp.where(len_b > thr[i], h_new, h)

    # h == concat([h_fwd, h_bwd], -1) already; apply Linear(2H, H).
    out_ref[...] = jnp.dot(h, w_lin, preferred_element_type=jnp.float32) + b_lin


# ---------------------------------------------------------------------------
# Parameter packing (wrapper-side, pure layout plumbing)
# ---------------------------------------------------------------------------
def _pack_params(params):
    """Pack PyTorch-shaped parameters into one lane-padded f32 slab."""
    H = params["w_hh_f"].shape[1]
    F = params["w_ih_f"].shape[1]
    G = 6 * H
    o_win, o_whh, o_wlin, o_bias, rows, lanes = _slab_layout(F, H)

    wihf = params["w_ih_f"].T.astype(jnp.float32)   # (F, 3H), cols [r z n]
    wihb = params["w_ih_b"].T.astype(jnp.float32)
    whhf = params["w_hh_f"].T.astype(jnp.float32)   # (H, 3H)
    whhb = params["w_hh_b"].T.astype(jnp.float32)

    def cols(w):
        return w[:, 0:H], w[:, H:2 * H], w[:, 2 * H:3 * H]

    rf_i, zf_i, nf_i = cols(wihf)
    rb_i, zb_i, nb_i = cols(wihb)
    rf_h, zf_h, nf_h = cols(whhf)
    rb_h, zb_h, nb_h = cols(whhb)

    # dense input projection, gate column layout [r_f r_b z_f z_b n_f n_b]
    w_in = jnp.concatenate([rf_i, rb_i, zf_i, zb_i, nf_i, nb_i], axis=1)  # (F, 6H)

    Zh = jnp.zeros((H, H), jnp.float32)
    w_hh = jnp.block([[rf_h, Zh, zf_h, Zh, nf_h, Zh],
                      [Zh, rb_h, Zh, zb_h, Zh, nb_h]])        # (2H, 6H)
    w_lin = params["w_lin"].T.astype(jnp.float32)             # (2H, H)

    def parts(b):
        return b[0:H], b[H:2 * H], b[2 * H:3 * H]

    rf_bi, zf_bi, nf_bi = parts(params["b_ih_f"])
    rb_bi, zb_bi, nb_bi = parts(params["b_ih_b"])
    rf_bh, zf_bh, nf_bh = parts(params["b_hh_f"])
    rb_bh, zb_bh, nb_bh = parts(params["b_hh_b"])

    # r,z parts of b_hh fold into the hoisted input-projection bias; only the
    # n-gate b_hh stays inside the recurrence (it multiplies r).
    b_in = jnp.concatenate([rf_bi + rf_bh, rb_bi + rb_bh,
                            zf_bi + zf_bh, zb_bi + zb_bh,
                            nf_bi, nb_bi]).astype(jnp.float32)   # (6H,)
    b_hn = jnp.concatenate([nf_bh, nb_bh]).astype(jnp.float32)   # (2H,)
    b_lin = params["b_lin"].astype(jnp.float32)                  # (H,)

    slab = jnp.zeros((rows, lanes), jnp.float32)
    slab = slab.at[o_win:o_win + F, :G].set(w_in)
    slab = slab.at[o_whh:o_whh + 2 * H, :G].set(w_hh)
    slab = slab.at[o_wlin:o_wlin + 2 * H, :H].set(w_lin)
    slab = slab.at[o_bias, :G].set(b_in)
    slab = slab.at[o_bias + 1, :2 * H].set(b_hn)
    slab = slab.at[o_bias + 2, :H].set(b_lin)
    return slab


# ---------------------------------------------------------------------------
# Forward wrapper
# ---------------------------------------------------------------------------
def gru_one_d_encoder_forward(to_x, x_timestamp_sizes, params, *, b_tile=None):
    """to_x: (B, T, F) float32 (batch_first), x_timestamp_sizes: (B,) int lengths."""
    B, T, F = to_x.shape
    H = params["w_hh_f"].shape[1]

    if b_tile is None:
        # TODO(synk): production batch sizes want b_tile ~128-512; re-derive per
        # generation (v7x scoped VMEM default 32 MiB / 64 MiB physical) and raise
        # vmem_limit_bytes if larger tiles are used.
        b_tile = min(256, _round_up(max(B, 1), 8))
    b_pad = _round_up(B, b_tile)

    x = jnp.asarray(to_x, jnp.float32)
    x_tm = jnp.transpose(x, (1, 0, 2))                          # (T, B, F) time-major
    lens = jnp.asarray(x_timestamp_sizes, jnp.int32).reshape(-1)
    if b_pad != B:
        x_tm = jnp.pad(x_tm, ((0, 0), (0, b_pad - B), (0, 0)))
        lens = jnp.pad(lens, (0, b_pad - B))   # padded rows: len=0 -> frozen at h=0
    len2d = lens.reshape(b_pad, 1)

    slab = _pack_params(params)
    rows, lanes = slab.shape

    out = pl.pallas_call(
        gru_encoder_kernel,
        out_shape=jax.ShapeDtypeStruct((b_pad, H), jnp.float32),
        grid_spec=pltpu.PrefetchScalarGridSpec(
            num_scalar_prefetch=0,
            grid=(b_pad // b_tile,),
            in_specs=[
                pl.BlockSpec((T, b_tile, F), lambda b: (0, b, 0)),
                pl.BlockSpec((b_tile, 1), lambda b: (b, 0)),
                pl.BlockSpec((rows, lanes), lambda b: (0, 0)),
            ],
            out_specs=pl.BlockSpec((b_tile, H), lambda b: (b, 0)),
            scratch_shapes=[pltpu.VMEM((T, b_tile, 6 * H), jnp.float32)],
        ),
        compiler_params=pltpu.CompilerParams(
            dimension_semantics=("parallel",)),
    )(x_tm, len2d, slab)

    return out[:B].reshape(B, 1, H)


# ---------------------------------------------------------------------------
# Parameters & pure-JAX reference (correctness check)
# ---------------------------------------------------------------------------
def init_params(key, feature_size, hidden=ENCODED_FEATURE_SIZE):
    """Deterministic synthetic parameters with PyTorch-like shapes."""
    H = hidden
    ks = jax.random.split(key, 10)
    s = 1.0 / jnp.sqrt(jnp.float32(H))

    def u(k, shape):
        return jax.random.uniform(k, shape, jnp.float32, -s, s)

    return dict(
        w_ih_f=u(ks[0], (3 * H, feature_size)),   # weight_ih_l0
        w_hh_f=u(ks[1], (3 * H, H)),              # weight_hh_l0
        b_ih_f=u(ks[2], (3 * H,)),
        b_hh_f=u(ks[3], (3 * H,)),
        w_ih_b=u(ks[4], (3 * H, feature_size)),   # weight_ih_l0_reverse
        w_hh_b=u(ks[5], (3 * H, H)),              # weight_hh_l0_reverse
        b_ih_b=u(ks[6], (3 * H,)),
        b_hh_b=u(ks[7], (3 * H,)),
        w_lin=u(ks[8], (H, 2 * H)),               # lstmEncoderForward.weight
        b_lin=u(ks[9], (H,)),                     # lstmEncoderForward.bias
    )


def reference_forward(to_x, lengths, params):
    """Pure-JAX reference with identical semantics (original param layout)."""
    B, T, _F = to_x.shape
    H = params["w_hh_f"].shape[1]
    lengths = jnp.asarray(lengths, jnp.int32)

    def cell(x_t, h, w_ih, w_hh, b_ih, b_hh):
        gi = x_t @ w_ih.T + b_ih
        gh = h @ w_hh.T + b_hh
        i_r, i_z, i_n = jnp.split(gi, 3, axis=-1)
        h_r, h_z, h_n = jnp.split(gh, 3, axis=-1)
        r = jax.nn.sigmoid(i_r + h_r)
        z = jax.nn.sigmoid(i_z + h_z)
        n = jnp.tanh(i_n + r * h_n)
        return (1.0 - z) * n + z * h

    h = jnp.zeros((B, H), jnp.float32)
    for t in range(T):
        h_new = cell(to_x[:, t], h, params["w_ih_f"], params["w_hh_f"],
                     params["b_ih_f"], params["b_hh_f"])
        h = jnp.where((lengths > t)[:, None], h_new, h)
    h_fwd = h

    h = jnp.zeros((B, H), jnp.float32)
    for t in range(T - 1, -1, -1):
        h_new = cell(to_x[:, t], h, params["w_ih_b"], params["w_hh_b"],
                     params["b_ih_b"], params["b_hh_b"])
        h = jnp.where((lengths > t)[:, None], h_new, h)
    h_bwd = h

    h_cat = jnp.concatenate([h_fwd, h_bwd], axis=-1)
    out = h_cat @ params["w_lin"].T + params["b_lin"]
    return out.reshape(B, 1, H)


if __name__ == "__main__":
    key = jax.random.PRNGKey(0)
    k_param, k_x = jax.random.split(key)

    # Small shapes consistent with the module: batch=2, seq=8, feature_size=4.
    B, T, F = 2, 8, 4
    params = init_params(k_param, feature_size=F)

    to_x = jax.random.normal(k_x, (B, T, F), jnp.float32)
    # pack_padded_sequence with enforce_sorted=True requires descending lengths.
    x_timestamp_sizes = jnp.array([8, 5], jnp.int32)

    out = gru_one_d_encoder_forward(to_x, x_timestamp_sizes, params)
    out = jax.block_until_ready(out)

    ref = reference_forward(to_x, x_timestamp_sizes, params)
    assert out.shape == (B, 1, ENCODED_FEATURE_SIZE)
    assert jnp.allclose(out, ref, atol=1e-4, rtol=1e-4), (
        f"max abs err = {jnp.max(jnp.abs(out - ref))}")

    print("KERNEL_OK")
</pallas_src>

<mosaic_0001>
module attributes {stable_mosaic.version = 11 : i64} {
  func.func @gru_encoder_kernel(%arg0: i32, %arg1: memref<8x8x4xf32, #tpu.memory_space<vmem>>, %arg2: memref<8x1xi32, #tpu.memory_space<vmem>>, %arg3: memref<96x128xf32, #tpu.memory_space<vmem>>, %arg4: memref<8x20xf32, #tpu.memory_space<vmem>>, %arg5: memref<8x8x120xf32, #tpu.memory_space<vmem>>) attributes {dimension_semantics = [#tpu.dimension_semantics<parallel>], iteration_bounds = array<i64: 1>, scalar_prefetch = 0 : i64, scratch_operands = 1 : i64, tpu.core_type = #tpu.core_type<tc>, window_params = [{transform_indices = @transform_0, window_bounds = array<i64: 8, 8, 4>}, {transform_indices = @transform_1, window_bounds = array<i64: 8, 1>}, {pipeline_mode = #tpu.pipeline_mode<synchronous>, transform_indices = @transform_2, window_bounds = array<i64: 96, 128>}, {transform_indices = @transform_3, window_bounds = array<i64: 8, 20>}]} {
    %c0 = arith.constant 0 : index
    %c0_0 = arith.constant 0 : index
    %0 = vector.load %arg3[%c0, %c0_0] : memref<96x128xf32, #tpu.memory_space<vmem>>, vector<4x120xf32>
    %c8 = arith.constant 8 : index
    %c0_1 = arith.constant 0 : index
    %1 = vector.load %arg3[%c8, %c0_1] : memref<96x128xf32, #tpu.memory_space<vmem>>, vector<40x120xf32>
    %c48 = arith.constant 48 : index
    %c0_2 = arith.constant 0 : index
    %2 = vector.load %arg3[%c48, %c0_2] : memref<96x128xf32, #tpu.memory_space<vmem>>, vector<40x20xf32>
    %c88 = arith.constant 88 : index
    %c0_3 = arith.constant 0 : index
    %3 = vector.load %arg3[%c88, %c0_3] : memref<96x128xf32, #tpu.memory_space<vmem>>, vector<1x120xf32>
    %c89 = arith.constant 89 : index
    %c0_4 = arith.constant 0 : index
    %4 = vector.load %arg3[%c89, %c0_4] : memref<96x128xf32, #tpu.memory_space<vmem>>, vector<1x40xf32>
    %c90 = arith.constant 90 : index
    %c0_5 = arith.constant 0 : index
    %5 = vector.load %arg3[%c90, %c0_5] : memref<96x128xf32, #tpu.memory_space<vmem>>, vector<1x20xf32>
    %c0_6 = arith.constant 0 : index
    %c0_7 = arith.constant 0 : index
    %6 = vector.load %arg2[%c0_6, %c0_7] : memref<8x1xi32, #tpu.memory_space<vmem>>, vector<8x1xi32>
    %c0_8 = arith.constant 0 : index
    %c0_9 = arith.constant 0 : index
    %c0_10 = arith.constant 0 : index
    %7 = vector.load %arg1[%c0_8, %c0_9, %c0_10] : memref<8x8x4xf32, #tpu.memory_space<vmem>>, vector<8x8x4xf32>
    %8 = vector.shape_cast %7 : vector<8x8x4xf32> to vector<64x4xf32>
    %cst = arith.constant dense<0.000000e+00> : vector<64x120xf32>
    %9 = tpu.matmul %8, %0, %cst {dimension_numbers = #tpu.dot_dimension_numbers<[1], [0], [0], [1], [0, 0, 1, 1], [], []>} : vector<64x4xf32>, vector<4x120xf32>, vector<64x120xf32> -> vector<64x120xf32>
    %10 = vector.broadcast %3 : vector<1x120xf32> to vector<64x120xf32>
    %11 = arith.addf %9, %10 : vector<64x120xf32>
    %12 = vector.shape_cast %11 : vector<64x120xf32> to vector<8x8x120xf32>
    %c0_11 = arith.constant 0 : index
    %c0_12 = arith.constant 0 : index
    %c0_13 = arith.constant 0 : index
    %13 = vector.load %arg5[%c0_11, %c0_12, %c0_13] : memref<8x8x120xf32, #tpu.memory_space<vmem>>, vector<8x8x120xf32>
    tpu.vector_store %arg5[%c0_11, %c0_12, %c0_13], %12 {strides = array<i32>} : memref<8x8x120xf32, #tpu.memory_space<vmem>>, vector<8x8x120xf32>,
    %14 = tpu.iota {dimensions = array<i32: 1>} : vector<1x120xi32>
    %c20_i32 = arith.constant 20 : i32
    %15 = vector.broadcast %c20_i32 : i32 to vector<1x120xi32>
    %16 = arith.cmpi slt, %14, %15 : vector<1x120xi32>
    %c40_i32 = arith.constant 40 : i32
    %17 = vector.broadcast %c40_i32 : i32 to vector<1x120xi32>
    %18 = arith.cmpi sge, %14, %17 : vector<1x120xi32>
    %c60_i32 = arith.constant 60 : i32
    %19 = vector.broadcast %c60_i32 : i32 to vector<1x120xi32>
    %20 = arith.cmpi slt, %14, %19 : vector<1x120xi32>
    %21 = arith.andi %18, %20 : vector<1x120xi1>
    %22 = arith.ori %16, %21 : vector<1x120xi1>
    %c80_i32 = arith.constant 80 : i32
    %23 = vector.broadcast %c80_i32 : i32 to vector<1x120xi32>
    %24 = arith.cmpi sge, %14, %23 : vector<1x120xi32>
    %c100_i32 = arith.constant 100 : i32
    %25 = vector.broadcast %c100_i32 : i32 to vector<1x120xi32>
    %26 = arith.cmpi slt, %14, %25 : vector<1x120xi32>
    %27 = arith.andi %24, %26 : vector<1x120xi1>
    %28 = arith.ori %22, %27 : vector<1x120xi1>
    %29 = tpu.iota {dimensions = array<i32: 1>} : vector<1x40xi32>
    %c20_i32_14 = arith.constant 20 : i32
    %30 = vector.broadcast %c20_i32_14 : i32 to vector<1x40xi32>
    %31 = arith.cmpi slt, %29, %30 : vector<1x40xi32>
    %32 = vector.shape_cast %6 : vector<8x1xi32> to vector<8x1xi32>
    %33 = vector.broadcast %32 : vector<8x1xi32> to vector<8x40xi32>
    %34 = vector.shape_cast %4 : vector<1x40xf32> to vector<1x40xf32>
    %35 = vector.broadcast %34 : vector<1x40xf32> to vector<8x40xf32>
    %c0_i32 = arith.constant 0 : i32
    %c7_i32 = arith.constant 7 : i32
    %36 = vector.broadcast %c0_i32 : i32 to vector<1x40xi32>
    %37 = vector.broadcast %c7_i32 : i32 to vector<1x40xi32>
    %38 = arith.select %31, %36, %37 : vector<1x40xi1>, vector<1x40xi32>
    %c1_i32 = arith.constant 1 : i32
    %c6_i32 = arith.constant 6 : i32
    %39 = vector.broadcast %c1_i32 : i32 to vector<1x40xi32>
    %40 = vector.broadcast %c6_i32 : i32 to vector<1x40xi32>
    %41 = arith.select %31, %39, %40 : vector<1x40xi1>, vector<1x40xi32>
    %c2_i32 = arith.constant 2 : i32
    %c5_i32 = arith.constant 5 : i32
    %42 = vector.broadcast %c2_i32 : i32 to vector<1x40xi32>
    %43 = vector.broadcast %c5_i32 : i32 to vector<1x40xi32>
    %44 = arith.select %31, %42, %43 : vector<1x40xi1>, vector<1x40xi32>
    %c3_i32 = arith.constant 3 : i32
    %c4_i32 = arith.constant 4 : i32
    %45 = vector.broadcast %c3_i32 : i32 to vector<1x40xi32>
    %46 = vector.broadcast %c4_i32 : i32 to vector<1x40xi32>
    %47 = arith.select %31, %45, %46 : vector<1x40xi1>, vector<1x40xi32>
    %c4_i32_15 = arith.constant 4 : i32
    %c3_i32_16 = arith.constant 3 : i32
    %48 = vector.broadcast %c4_i32_15 : i32 to vector<1x40xi32>
    %49 = vector.broadcast %c3_i32_16 : i32 to vector<1x40xi32>
    %50 = arith.select %31, %48, %49 : vector<1x40xi1>, vector<1x40xi32>
    %c5_i32_17 = arith.constant 5 : i32
    %c2_i32_18 = arith.constant 2 : i32
    %51 = vector.broadcast %c5_i32_17 : i32 to vector<1x40xi32>
    %52 = vector.broadcast %c2_i32_18 : i32 to vector<1x40xi32>
    %53 = arith.select %31, %51, %52 : vector<1x40xi1>, vector<1x40xi32>
    %c6_i32_19 = arith.constant 6 : i32
    %c1_i32_20 = arith.constant 1 : i32
    %54 = vector.broadcast %c6_i32_19 : i32 to vector<1x40xi32>
    %55 = vector.broadcast %c1_i32_20 : i32 to vector<1x40xi32>
    %56 = arith.select %31, %54, %55 : vector<1x40xi1>, vector<1x40xi32>
    %c7_i32_21 = arith.constant 7 : i32
    %c0_i32_22 = arith.constant 0 : i32
    %57 = vector.broadcast %c7_i32_21 : i32 to vector<1x40xi32>
    %58 = vector.broadcast %c0_i32_22 : i32 to vector<1x40xi32>
    %59 = arith.select %31, %57, %58 : vector<1x40xi1>, vector<1x40xi32>
    %cst_23 = arith.constant 0.000000e+00 : f32
    %60 = vector.broadcast %cst_23 : f32 to vector<8x40xf32>
    %c0_24 = arith.constant 0 : index
    %c0_25 = arith.constant 0 : index
    %c0_26 = arith.constant 0 : index
    %61 = vector.load %arg5[%c0_24, %c0_25, %c0_26] : memref<8x8x120xf32, #tpu.memory_space<vmem>>, vector<1x8x120xf32>
    %62 = vector.shape_cast %61 : vector<1x8x120xf32> to vector<8x120xf32>
    %c7 = arith.constant 7 : index
    %c0_27 = arith.constant 0 : index
    %c0_28 = arith.constant 0 : index
    %63 = vector.load %arg5[%c7, %c0_27, %c0_28] : memref<8x8x120xf32, #tpu.memory_space<vmem>>, vector<1x8x120xf32>
    %64 = vector.shape_cast %63 : vector<1x8x120xf32> to vector<8x120xf32>
    %65 = vector.shape_cast %28 : vector<1x120xi1> to vector<1x120xi1>
    %66 = vector.broadcast %65 : vector<1x120xi1> to vector<8x120xi1>
    %67 = arith.select %66, %62, %64 : vector<8x120xi1>, vector<8x120xf32>
    %cst_29 = arith.constant dense<0.000000e+00> : vector<8x120xf32>
    %68 = tpu.matmul %60, %1, %cst_29 {dimension_numbers = #tpu.dot_dimension_numbers<[1], [0], [0], [1], [0, 0, 1, 1], [], []>} : vector<8x40xf32>, vector<40x120xf32>, vector<8x120xf32> -> vector<8x120xf32>
    %69 = vector.extract_strided_slice %67 {offsets = [0, 0], sizes = [8, 80], strides = [1, 1]} : vector<8x120xf32> to vector<8x80xf32>
    %70 = vector.extract_strided_slice %68 {offsets = [0, 0], sizes = [8, 80], strides = [1, 1]} : vector<8x120xf32> to vector<8x80xf32>
    %71 = arith.addf %69, %70 : vector<8x80xf32>
    %72 = arith.negf %71 : vector<8x80xf32>
    %73 = math.exp %72 : vector<8x80xf32>
    %cst_30 = arith.constant 1.000000e+00 : f32
    %74 = vector.broadcast %cst_30 : f32 to vector<8x80xf32>
    %75 = arith.addf %74, %73 : vector<8x80xf32>
    %76 = arith.divf %74, %75 : vector<8x80xf32>
    %77 = vector.extract_strided_slice %76 {offsets = [0, 0], sizes = [8, 40], strides = [1, 1]} : vector<8x80xf32> to vector<8x40xf32>
    %78 = vector.extract_strided_slice %76 {offsets = [0, 40], sizes = [8, 40], strides = [1, 1]} : vector<8x80xf32> to vector<8x40xf32>
    %79 = vector.extract_strided_slice %67 {offsets = [0, 80], sizes = [8, 40], strides = [1, 1]} : vector<8x120xf32> to vector<8x40xf32>
    %80 = vector.extract_strided_slice %68 {offsets = [0, 80], sizes = [8, 40], strides = [1, 1]} : vector<8x120xf32> to vector<8x40xf32>
    %81 = arith.addf %80, %35 : vector<8x40xf32>
    %82 = arith.mulf %77, %81 : vector<8x40xf32>
    %83 = arith.addf %79, %82 : vector<8x40xf32>
    %84 = math.tanh %83 : vector<8x40xf32>
    %cst_31 = arith.constant 1.000000e+00 : f32
    %85 = vector.broadcast %cst_31 : f32 to vector<8x40xf32>
    %86 = arith.subf %85, %78 : vector<8x40xf32>
    %87 = arith.mulf %86, %84 : vector<8x40xf32>
    %88 = arith.mulf %78, %60 : vector<8x40xf32>
    %89 = arith.addf %87, %88 : vector<8x40xf32>
    %90 = vector.broadcast %38 : vector<1x40xi32> to vector<8x40xi32>
    %91 = arith.cmpi sgt, %33, %90 : vector<8x40xi32>
    %92 = arith.select %91, %89, %60 : vector<8x40xi1>, vector<8x40xf32>
    %c1 = arith.constant 1 : index
    %c0_32 = arith.constant 0 : index
    %c0_33 = arith.constant 0 : index
    %93 = vector.load %arg5[%c1, %c0_32, %c0_33] : memref<8x8x120xf32, #tpu.memory_space<vmem>>, vector<1x8x120xf32>
    %94 = vector.shape_cast %93 : vector<1x8x120xf32> to vector<8x120xf32>
    %c6 = arith.constant 6 : index
    %c0_34 = arith.constant 0 : index
    %c0_35 = arith.constant 0 : index
    %95 = vector.load %arg5[%c6, %c0_34, %c0_35] : memref<8x8x120xf32, #tpu.memory_space<vmem>>, vector<1x8x120xf32>
    %96 = vector.shape_cast %95 : vector<1x8x120xf32> to vector<8x120xf32>
    %97 = vector.shape_cast %28 : vector<1x120xi1> to vector<1x120xi1>
    %98 = vector.broadcast %97 : vector<1x120xi1> to vector<8x120xi1>
    %99 = arith.select %98, %94, %96 : vector<8x120xi1>, vector<8x120xf32>
    %cst_36 = arith.constant dense<0.000000e+00> : vector<8x120xf32>
    %100 = tpu.matmul %92, %1, %cst_36 {dimension_numbers = #tpu.dot_dimension_numbers<[1], [0], [0], [1], [0, 0, 1, 1], [], []>} : vector<8x40xf32>, vector<40x120xf32>, vector<8x120xf32> -> vector<8x120xf32>
    %101 = vector.extract_strided_slice %99 {offsets = [0, 0], sizes = [8, 80], strides = [1, 1]} : vector<8x120xf32> to vector<8x80xf32>
    %102 = vector.extract_strided_slice %100 {offsets = [0, 0], sizes = [8, 80], strides = [1, 1]} : vector<8x120xf32> to vector<8x80xf32>
    %103 = arith.addf %101, %102 : vector<8x80xf32>
    %104 = arith.negf %103 : vector<8x80xf32>
    %105 = math.exp %104 : vector<8x80xf32>
    %cst_37 = arith.constant 1.000000e+00 : f32
    %106 = vector.broadcast %cst_37 : f32 to vector<8x80xf32>
    %107 = arith.addf %106, %105 : vector<8x80xf32>
    %108 = arith.divf %106, %107 : vector<8x80xf32>
    %109 = vector.extract_strided_slice %108 {offsets = [0, 0], sizes = [8, 40], strides = [1, 1]} : vector<8x80xf32> to vector<8x40xf32>
    %110 = vector.extract_strided_slice %108 {offsets = [0, 40], sizes = [8, 40], strides = [1, 1]} : vector<8x80xf32> to vector<8x40xf32>
    %111 = vector.extract_strided_slice %99 {offsets = [0, 80], sizes = [8, 40], strides = [1, 1]} : vector<8x120xf32> to vector<8x40xf32>
    %112 = vector.extract_strided_slice %100 {offsets = [0, 80], sizes = [8, 40], strides = [1, 1]} : vector<8x120xf32> to vector<8x40xf32>
    %113 = arith.addf %112, %35 : vector<8x40xf32>
    %114 = arith.mulf %109, %113 : vector<8x40xf32>
    %115 = arith.addf %111, %114 : vector<8x40xf32>
    %116 = math.tanh %115 : vector<8x40xf32>
    %cst_38 = arith.constant 1.000000e+00 : f32
    %117 = vector.broadcast %cst_38 : f32 to vector<8x40xf32>
    %118 = arith.subf %117, %110 : vector<8x40xf32>
    %119 = arith.mulf %118, %116 : vector<8x40xf32>
    %120 = arith.mulf %110, %92 : vector<8x40xf32>
    %121 = arith.addf %119, %120 : vector<8x40xf32>
    %122 = vector.broadcast %41 : vector<1x40xi32> to vector<8x40xi32>
    %123 = arith.cmpi sgt, %33, %122 : vector<8x40xi32>
    %124 = arith.select %123, %121, %92 : vector<8x40xi1>, vector<8x40xf32>
    %c2 = arith.constant 2 : index
    %c0_39 = arith.constant 0 : index
    %c0_40 = arith.constant 0 : index
    %125 = vector.load %arg5[%c2, %c0_39, %c0_40] : memref<8x8x120xf32, #tpu.memory_space<vmem>>, vector<1x8x120xf32>
    %126 = vector.shape_cast %125 : vector<1x8x120xf32> to vector<8x120xf32>
    %c5 = arith.constant 5 : index
    %c0_41 = arith.constant 0 : index
    %c0_42 = arith.constant 0 : index
    %127 = vector.load %arg5[%c5, %c0_41, %c0_42] : memref<8x8x120xf32, #tpu.memory_space<vmem>>, vector<1x8x120xf32>
    %128 = vector.shape_cast %127 : vector<1x8x120xf32> to vector<8x120xf32>
    %129 = vector.shape_cast %28 : vector<1x120xi1> to vector<1x120xi1>
    %130 = vector.broadcast %129 : vector<1x120xi1> to vector<8x120xi1>
    %131 = arith.select %130, %126, %128 : vector<8x120xi1>, vector<8x120xf32>
    %cst_43 = arith.constant dense<0.000000e+00> : vector<8x120xf32>
    %132 = tpu.matmul %124, %1, %cst_43 {dimension_numbers = #tpu.dot_dimension_numbers<[1], [0], [0], [1], [0, 0, 1, 1], [], []>} : vector<8x40xf32>, vector<40x120xf32>, vector<8x120xf32> -> vector<8x120xf32>
    %133 = vector.extract_strided_slice %131 {offsets = [0, 0], sizes = [8, 80], strides = [1, 1]} : vector<8x120xf32> to vector<8x80xf32>
    %134 = vector.extract_strided_slice %132 {offsets = [0, 0], sizes = [8, 80], strides = [1, 1]} : vector<8x120xf32> to vector<8x80xf32>
    %135 = arith.addf %133, %134 : vector<8x80xf32>
    %136 = arith.negf %135 : vector<8x80xf32>
    %137 = math.exp %136 : vector<8x80xf32>
    %cst_44 = arith.constant 1.000000e+00 : f32
    %138 = vector.broadcast %cst_44 : f32 to vector<8x80xf32>
    %139 = arith.addf %138, %137 : vector<8x80xf32>
    %140 = arith.divf %138, %139 : vector<8x80xf32>
    %141 = vector.extract_strided_slice %140 {offsets = [0, 0], sizes = [8, 40], strides = [1, 1]} : vector<8x80xf32> to vector<8x40xf32>
    %142 = vector.extract_strided_slice %140 {offsets = [0, 40], sizes = [8, 40], strides = [1, 1]} : vector<8x80xf32> to vector<8x40xf32>
    %143 = vector.extract_strided_slice %131 {offsets = [0, 80], sizes = [8, 40], strides = [1, 1]} : vector<8x120xf32> to vector<8x40xf32>
    %144 = vector.extract_strided_slice %132 {offsets = [0, 80], sizes = [8, 40], strides = [1, 1]} : vector<8x120xf32> to vector<8x40xf32>
    %145 = arith.addf %144, %35 : vector<8x40xf32>
    %146 = arith.mulf %141, %145 : vector<8x40xf32>
    %147 = arith.addf %143, %146 : vector<8x40xf32>
    %148 = math.tanh %147 : vector<8x40xf32>
    %cst_45 = arith.constant 1.000000e+00 : f32
    %149 = vector.broadcast %cst_45 : f32 to vector<8x40xf32>
    %150 = arith.subf %149, %142 : vector<8x40xf32>
    %151 = arith.mulf %150, %148 : vector<8x40xf32>
    %152 = arith.mulf %142, %124 : vector<8x40xf32>
    %153 = arith.addf %151, %152 : vector<8x40xf32>
    %154 = vector.broadcast %44 : vector<1x40xi32> to vector<8x40xi32>
    %155 = arith.cmpi sgt, %33, %154 : vector<8x40xi32>
    %156 = arith.select %155, %153, %124 : vector<8x40xi1>, vector<8x40xf32>
    %c3 = arith.constant 3 : index
    %c0_46 = arith.constant 0 : index
    %c0_47 = arith.constant 0 : index
    %157 = vector.load %arg5[%c3, %c0_46, %c0_47] : memref<8x8x120xf32, #tpu.memory_space<vmem>>, vector<1x8x120xf32>
    %158 = vector.shape_cast %157 : vector<1x8x120xf32> to vector<8x120xf32>
    %c4 = arith.constant 4 : index
    %c0_48 = arith.constant 0 : index
    %c0_49 = arith.constant 0 : index
    %159 = vector.load %arg5[%c4, %c0_48, %c0_49] : memref<8x8x120xf32, #tpu.memory_space<vmem>>, vector<1x8x120xf32>
    %160 = vector.shape_cast %159 : vector<1x8x120xf32> to vector<8x120xf32>
    %161 = vector.shape_cast %28 : vector<1x120xi1> to vector<1x120xi1>
    %162 = vector.broadcast %161 : vector<1x120xi1> to vector<8x120xi1>
    %163 = arith.select %162, %158, %160 : vector<8x120xi1>, vector<8x120xf32>
    %cst_50 = arith.constant dense<0.000000e+00> : vector<8x120xf32>
    %164 = tpu.matmul %156, %1, %cst_50 {dimension_numbers = #tpu.dot_dimension_numbers<[1], [0], [0], [1], [0, 0, 1, 1], [], []>} : vector<8x40xf32>, vector<40x120xf32>, vector<8x120xf32> -> vector<8x120xf32>
    %165 = vector.extract_strided_slice %163 {offsets = [0, 0], sizes = [8, 80], strides = [1, 1]} : vector<8x120xf32> to vector<8x80xf32>
    %166 = vector.extract_strided_slice %164 {offsets = [0, 0], sizes = [8, 80], strides = [1, 1]} : vector<8x120xf32> to vector<8x80xf32>
    %167 = arith.addf %165, %166 : vector<8x80xf32>
    %168 = arith.negf %167 : vector<8x80xf32>
    %169 = math.exp %168 : vector<8x80xf32>
    %cst_51 = arith.constant 1.000000e+00 : f32
    %170 = vector.broadcast %cst_51 : f32 to vector<8x80xf32>
    %171 = arith.addf %170, %169 : vector<8x80xf32>
    %172 = arith.divf %170, %171 : vector<8x80xf32>
    %173 = vector.extract_strided_slice %172 {offsets = [0, 0], sizes = [8, 40], strides = [1, 1]} : vector<8x80xf32> to vector<8x40xf32>
    %174 = vector.extract_strided_slice %172 {offsets = [0, 40], sizes = [8, 40], strides = [1, 1]} : vector<8x80xf32> to vector<8x40xf32>
    %175 = vector.extract_strided_slice %163 {offsets = [0, 80], sizes = [8, 40], strides = [1, 1]} : vector<8x120xf32> to vector<8x40xf32>
    %176 = vector.extract_strided_slice %164 {offsets = [0, 80], sizes = [8, 40], strides = [1, 1]} : vector<8x120xf32> to vector<8x40xf32>
    %177 = arith.addf %176, %35 : vector<8x40xf32>
    %178 = arith.mulf %173, %177 : vector<8x40xf32>
    %179 = arith.addf %175, %178 : vector<8x40xf32>
    %180 = math.tanh %179 : vector<8x40xf32>
    %cst_52 = arith.constant 1.000000e+00 : f32
    %181 = vector.broadcast %cst_52 : f32 to vector<8x40xf32>
    %182 = arith.subf %181, %174 : vector<8x40xf32>
    %183 = arith.mulf %182, %180 : vector<8x40xf32>
    %184 = arith.mulf %174, %156 : vector<8x40xf32>
    %185 = arith.addf %183, %184 : vector<8x40xf32>
    %186 = vector.broadcast %47 : vector<1x40xi32> to vector<8x40xi32>
    %187 = arith.cmpi sgt, %33, %186 : vector<8x40xi32>
    %188 = arith.select %187, %185, %156 : vector<8x40xi1>, vector<8x40xf32>
    %c4_53 = arith.constant 4 : index
    %c0_54 = arith.constant 0 : index
    %c0_55 = arith.constant 0 : index
    %189 = vector.load %arg5[%c4_53, %c0_54, %c0_55] : memref<8x8x120xf32, #tpu.memory_space<vmem>>, vector<1x8x120xf32>
    %190 = vector.shape_cast %189 : vector<1x8x120xf32> to vector<8x120xf32>
    %c3_56 = arith.constant 3 : index
    %c0_57 = arith.constant 0 : index
    %c0_58 = arith.constant 0 : index
    %191 = vector.load %arg5[%c3_56, %c0_57, %c0_58] : memref<8x8x120xf32, #tpu.memory_space<vmem>>, vector<1x8x120xf32>
    %192 = vector.shape_cast %191 : vector<1x8x120xf32> to vector<8x120xf32>
    %193 = vector.shape_cast %28 : vector<1x120xi1> to vector<1x120xi1>
    %194 = vector.broadcast %193 : vector<1x120xi1> to vector<8x120xi1>
    %195 = arith.select %194, %190, %192 : vector<8x120xi1>, vector<8x120xf32>
    %cst_59 = arith.constant dense<0.000000e+00> : vector<8x120xf32>
    %196 = tpu.matmul %188, %1, %cst_59 {dimension_numbers = #tpu.dot_dimension_numbers<[1], [0], [0], [1], [0, 0, 1, 1], [], []>} : vector<8x40xf32>, vector<40x120xf32>, vector<8x120xf32> -> vector<8x120xf32>
    %197 = vector.extract_strided_slice %195 {offsets = [0, 0], sizes = [8, 80], strides = [1, 1]} : vector<8x120xf32> to vector<8x80xf32>
    %198 = vector.extract_strided_slice %196 {offsets = [0, 0], sizes = [8, 80], strides = [1, 1]} : vector<8x120xf32> to vector<8x80xf32>
    %199 = arith.addf %197, %198 : vector<8x80xf32>
    %200 = arith.negf %199 : vector<8x80xf32>
    %201 = math.exp %200 : vector<8x80xf32>
    %cst_60 = arith.constant 1.000000e+00 : f32
    %202 = vector.broadcast %cst_60 : f32 to vector<8x80xf32>
    %203 = arith.addf %202, %201 : vector<8x80xf32>
    %204 = arith.divf %202, %203 : vector<8x80xf32>
    %205 = vector.extract_strided_slice %204 {offsets = [0, 0], sizes = [8, 40], strides = [1, 1]} : vector<8x80xf32> to vector<8x40xf32>
    %206 = vector.extract_strided_slice %204 {offsets = [0, 40], sizes = [8, 40], strides = [1, 1]} : vector<8x80xf32> to vector<8x40xf32>
    %207 = vector.extract_strided_slice %195 {offsets = [0, 80], sizes = [8, 40], strides = [1, 1]} : vector<8x120xf32> to vector<8x40xf32>
    %208 = vector.extract_strided_slice %196 {offsets = [0, 80], sizes = [8, 40], strides = [1, 1]} : vector<8x120xf32> to vector<8x40xf32>
    %209 = arith.addf %208, %35 : vector<8x40xf32>
    %210 = arith.mulf %205, %209 : vector<8x40xf32>
    %211 = arith.addf %207, %210 : vector<8x40xf32>
    %212 = math.tanh %211 : vector<8x40xf32>
    %cst_61 = arith.constant 1.000000e+00 : f32
    %213 = vector.broadcast %cst_61 : f32 to vector<8x40xf32>
    %214 = arith.subf %213, %206 : vector<8x40xf32>
    %215 = arith.mulf %214, %212 : vector<8x40xf32>
    %216 = arith.mulf %206, %188 : vector<8x40xf32>
    %217 = arith.addf %215, %216 : vector<8x40xf32>
    %218 = vector.broadcast %50 : vector<1x40xi32> to vector<8x40xi32>
    %219 = arith.cmpi sgt, %33, %218 : vector<8x40xi32>
    %220 = arith.select %219, %217, %188 : vector<8x40xi1>, vector<8x40xf32>
    %c5_62 = arith.constant 5 : index
    %c0_63 = arith.constant 0 : index
    %c0_64 = arith.constant 0 : index
    %221 = vector.load %arg5[%c5_62, %c0_63, %c0_64] : memref<8x8x120xf32, #tpu.memory_space<vmem>>, vector<1x8x120xf32>
    %222 = vector.shape_cast %221 : vector<1x8x120xf32> to vector<8x120xf32>
    %c2_65 = arith.constant 2 : index
    %c0_66 = arith.constant 0 : index
    %c0_67 = arith.constant 0 : index
    %223 = vector.load %arg5[%c2_65, %c0_66, %c0_67] : memref<8x8x120xf32, #tpu.memory_space<vmem>>, vector<1x8x120xf32>
    %224 = vector.shape_cast %223 : vector<1x8x120xf32> to vector<8x120xf32>
    %225 = vector.shape_cast %28 : vector<1x120xi1> to vector<1x120xi1>
    %226 = vector.broadcast %225 : vector<1x120xi1> to vector<8x120xi1>
    %227 = arith.select %226, %222, %224 : vector<8x120xi1>, vector<8x120xf32>
    %cst_68 = arith.constant dense<0.000000e+00> : vector<8x120xf32>
    %228 = tpu.matmul %220, %1, %cst_68 {dimension_numbers = #tpu.dot_dimension_numbers<[1], [0], [0], [1], [0, 0, 1, 1], [], []>} : vector<8x40xf32>, vector<40x120xf32>, vector<8x120xf32> -> vector<8x120xf32>
    %229 = vector.extract_strided_slice %227 {offsets = [0, 0], sizes = [8, 80], strides = [1, 1]} : vector<8x120xf32> to vector<8x80xf32>
    %230 = vector.extract_strided_slice %228 {offsets = [0, 0], sizes = [8, 80], strides = [1, 1]} : vector<8x120xf32> to vector<8x80xf32>
    %231 = arith.addf %229, %230 : vector<8x80xf32>
    %232 = arith.negf %231 : vector<8x80xf32>
    %233 = math.exp %232 : vector<8x80xf32>
    %cst_69 = arith.constant 1.000000e+00 : f32
    %234 = vector.broadcast %cst_69 : f32 to vector<8x80xf32>
    %235 = arith.addf %234, %233 : vector<8x80xf32>
    %236 = arith.divf %234, %235 : vector<8x80xf32>
    %237 = vector.extract_strided_slice %236 {offsets = [0, 0], sizes = [8, 40], strides = [1, 1]} : vector<8x80xf32> to vector<8x40xf32>
    %238 = vector.extract_strided_slice %236 {offsets = [0, 40], sizes = [8, 40], strides = [1, 1]} : vector<8x80xf32> to vector<8x40xf32>
    %239 = vector.extract_strided_slice %227 {offsets = [0, 80], sizes = [8, 40], strides = [1, 1]} : vector<8x120xf32> to vector<8x40xf32>
    %240 = vector.extract_strided_slice %228 {offsets = [0, 80], sizes = [8, 40], strides = [1, 1]} : vector<8x120xf32> to vector<8x40xf32>
    %241 = arith.addf %240, %35 : vector<8x40xf32>
    %242 = arith.mulf %237, %241 : vector<8x40xf32>
    %243 = arith.addf %239, %242 : vector<8x40xf32>
    %244 = math.tanh %243 : vector<8x40xf32>
    %cst_70 = arith.constant 1.000000e+00 : f32
    %245 = vector.broadcast %cst_70 : f32 to vector<8x40xf32>
    %246 = arith.subf %245, %238 : vector<8x40xf32>
    %247 = arith.mulf %246, %244 : vector<8x40xf32>
    %248 = arith.mulf %238, %220 : vector<8x40xf32>
    %249 = arith.addf %247, %248 : vector<8x40xf32>
    %250 = vector.broadcast %53 : vector<1x40xi32> to vector<8x40xi32>
    %251 = arith.cmpi sgt, %33, %250 : vector<8x40xi32>
    %252 = arith.select %251, %249, %220 : vector<8x40xi1>, vector<8x40xf32>
    %c6_71 = arith.constant 6 : index
    %c0_72 = arith.constant 0 : index
    %c0_73 = arith.constant 0 : index
    %253 = vector.load %arg5[%c6_71, %c0_72, %c0_73] : memref<8x8x120xf32, #tpu.memory_space<vmem>>, vector<1x8x120xf32>
    %254 = vector.shape_cast %253 : vector<1x8x120xf32> to vector<8x120xf32>
    %c1_74 = arith.constant 1 : index
    %c0_75 = arith.constant 0 : index
    %c0_76 = arith.constant 0 : index
    %255 = vector.load %arg5[%c1_74, %c0_75, %c0_76] : memref<8x8x120xf32, #tpu.memory_space<vmem>>, vector<1x8x120xf32>
    %256 = vector.shape_cast %255 : vector<1x8x120xf32> to vector<8x120xf32>
    %257 = vector.shape_cast %28 : vector<1x120xi1> to vector<1x120xi1>
    %258 = vector.broadcast %257 : vector<1x120xi1> to vector<8x120xi1>
    %259 = arith.select %258, %254, %256 : vector<8x120xi1>, vector<8x120xf32>
    %cst_77 = arith.constant dense<0.000000e+00> : vector<8x120xf32>
    %260 = tpu.matmul %252, %1, %cst_77 {dimension_numbers = #tpu.dot_dimension_numbers<[1], [0], [0], [1], [0, 0, 1, 1], [], []>} : vector<8x40xf32>, vector<40x120xf32>, vector<8x120xf32> -> vector<8x120xf32>
    %261 = vector.extract_strided_slice %259 {offsets = [0, 0], sizes = [8, 80], strides = [1, 1]} : vector<8x120xf32> to vector<8x80xf32>
    %262 = vector.extract_strided_slice %260 {offsets = [0, 0], sizes = [8, 80], strides = [1, 1]} : vector<8x120xf32> to vector<8x80xf32>
    %263 = arith.addf %261, %262 : vector<8x80xf32>
    %264 = arith.negf %263 : vector<8x80xf32>
    %265 = math.exp %264 : vector<8x80xf32>
    %cst_78 = arith.constant 1.000000e+00 : f32
    %266 = vector.broadcast %cst_78 : f32 to vector<8x80xf32>
    %267 = arith.addf %266, %265 : vector<8x80xf32>
    %268 = arith.divf %266, %267 : vector<8x80xf32>
    %269 = vector.extract_strided_slice %268 {offsets = [0, 0], sizes = [8, 40], strides = [1, 1]} : vector<8x80xf32> to vector<8x40xf32>
    %270 = vector.extract_strided_slice %268 {offsets = [0, 40], sizes = [8, 40], strides = [1, 1]} : vector<8x80xf32> to vector<8x40xf32>
    %271 = vector.extract_strided_slice %259 {offsets = [0, 80], sizes = [8, 40], strides = [1, 1]} : vector<8x120xf32> to vector<8x40xf32>
    %272 = vector.extract_strided_slice %260 {offsets = [0, 80], sizes = [8, 40], strides = [1, 1]} : vector<8x120xf32> to vector<8x40xf32>
    %273 = arith.addf %272, %35 : vector<8x40xf32>
    %274 = arith.mulf %269, %273 : vector<8x40xf32>
    %275 = arith.addf %271, %274 : vector<8x40xf32>
    %276 = math.tanh %275 : vector<8x40xf32>
    %cst_79 = arith.constant 1.000000e+00 : f32
    %277 = vector.broadcast %cst_79 : f32 to vector<8x40xf32>
    %278 = arith.subf %277, %270 : vector<8x40xf32>
    %279 = arith.mulf %278, %276 : vector<8x40xf32>
    %280 = arith.mulf %270, %252 : vector<8x40xf32>
    %281 = arith.addf %279, %280 : vector<8x40xf32>
    %282 = vector.broadcast %56 : vector<1x40xi32> to vector<8x40xi32>
    %283 = arith.cmpi sgt, %33, %282 : vector<8x40xi32>
    %284 = arith.select %283, %281, %252 : vector<8x40xi1>, vector<8x40xf32>
    %c7_80 = arith.constant 7 : index
    %c0_81 = arith.constant 0 : index
    %c0_82 = arith.constant 0 : index
    %285 = vector.load %arg5[%c7_80, %c0_81, %c0_82] : memref<8x8x120xf32, #tpu.memory_space<vmem>>, vector<1x8x120xf32>
    %286 = vector.shape_cast %285 : vector<1x8x120xf32> to vector<8x120xf32>
    %c0_83 = arith.constant 0 : index
    %c0_84 = arith.constant 0 : index
    %c0_85 = arith.constant 0 : index
    %287 = vector.load %arg5[%c0_83, %c0_84, %c0_85] : memref<8x8x120xf32, #tpu.memory_space<vmem>>, vector<1x8x120xf32>
    %288 = vector.shape_cast %287 : vector<1x8x120xf32> to vector<8x120xf32>
    %289 = vector.shape_cast %28 : vector<1x120xi1> to vector<1x120xi1>
    %290 = vector.broadcast %289 : vector<1x120xi1> to vector<8x120xi1>
    %291 = arith.select %290, %286, %288 : vector<8x120xi1>, vector<8x120xf32>
    %cst_86 = arith.constant dense<0.000000e+00> : vector<8x120xf32>
    %292 = tpu.matmul %284, %1, %cst_86 {dimension_numbers = #tpu.dot_dimension_numbers<[1], [0], [0], [1], [0, 0, 1, 1], [], []>} : vector<8x40xf32>, vector<40x120xf32>, vector<8x120xf32> -> vector<8x120xf32>
    %293 = vector.extract_strided_slice %291 {offsets = [0, 0], sizes = [8, 80], strides = [1, 1]} : vector<8x120xf32> to vector<8x80xf32>
    %294 = vector.extract_strided_slice %292 {offsets = [0, 0], sizes = [8, 80], strides = [1, 1]} : vector<8x120xf32> to vector<8x80xf32>
    %295 = arith.addf %293, %294 : vector<8x80xf32>
    %296 = arith.negf %295 : vector<8x80xf32>
    %297 = math.exp %296 : vector<8x80xf32>
    %cst_87 = arith.constant 1.000000e+00 : f32
    %298 = vector.broadcast %cst_87 : f32 to vector<8x80xf32>
    %299 = arith.addf %298, %297 : vector<8x80xf32>
    %300 = arith.divf %298, %299 : vector<8x80xf32>
    %301 = vector.extract_strided_slice %300 {offsets = [0, 0], sizes = [8, 40], strides = [1, 1]} : vector<8x80xf32> to vector<8x40xf32>
    %302 = vector.extract_strided_slice %300 {offsets = [0, 40], sizes = [8, 40], strides = [1, 1]} : vector<8x80xf32> to vector<8x40xf32>
    %303 = vector.extract_strided_slice %291 {offsets = [0, 80], sizes = [8, 40], strides = [1, 1]} : vector<8x120xf32> to vector<8x40xf32>
    %304 = vector.extract_strided_slice %292 {offsets = [0, 80], sizes = [8, 40], strides = [1, 1]} : vector<8x120xf32> to vector<8x40xf32>
    %305 = arith.addf %304, %35 : vector<8x40xf32>
    %306 = arith.mulf %301, %305 : vector<8x40xf32>
    %307 = arith.addf %303, %306 : vector<8x40xf32>
    %308 = math.tanh %307 : vector<8x40xf32>
    %cst_88 = arith.constant 1.000000e+00 : f32
    %309 = vector.broadcast %cst_88 : f32 to vector<8x40xf32>
    %310 = arith.subf %309, %302 : vector<8x40xf32>
    %311 = arith.mulf %310, %308 : vector<8x40xf32>
    %312 = arith.mulf %302, %284 : vector<8x40xf32>
    %313 = arith.addf %311, %312 : vector<8x40xf32>
    %314 = vector.broadcast %59 : vector<1x40xi32> to vector<8x40xi32>
    %315 = arith.cmpi sgt, %33, %314 : vector<8x40xi32>
    %316 = arith.select %315, %313, %284 : vector<8x40xi1>, vector<8x40xf32>
    %cst_89 = arith.constant dense<0.000000e+00> : vector<8x20xf32>
    %317 = tpu.matmul %316, %2, %cst_89 {dimension_numbers = #tpu.dot_dimension_numbers<[1], [0], [0], [1], [0, 0, 1, 1], [], []>} : vector<8x40xf32>, vector<40x20xf32>, vector<8x20xf32> -> vector<8x20xf32>
    %318 = vector.broadcast %5 : vector<1x20xf32> to vector<8x20xf32>
    %319 = arith.addf %317, %318 : vector<8x20xf32>
    %c0_90 = arith.constant 0 : index
    %c0_91 = arith.constant 0 : index
    %320 = vector.load %arg4[%c0_90, %c0_91] : memref<8x20xf32, #tpu.memory_space<vmem>>, vector<8x20xf32>
    tpu.vector_store %arg4[%c0_90, %c0_91], %319 {strides = array<i32>} : memref<8x20xf32, #tpu.memory_space<vmem>>, vector<8x20xf32>,
    return
  }
  func.func @transform_0(%arg0: i32) -> (i32, i32, i32) {
    %c0_i32 = arith.constant 0 : i32
    %c0_i32_0 = arith.constant 0 : i32
    %c0_i32_1 = arith.constant 0 : i32
    return %c0_i32, %arg0, %c0_i32_0 : i32, i32, i32
  }
  func.func @transform_1(%arg0: i32) -> (i32, i32) {
    %c0_i32 = arith.constant 0 : i32
    %c0_i32_0 = arith.constant 0 : i32
    return %arg0, %c0_i32 : i32, i32
  }
  func.func @transform_2(%arg0: i32) -> (i32, i32) {
    %c0_i32 = arith.constant 0 : i32
    %c0_i32_0 = arith.constant 0 : i32
    %c0_i32_1 = arith.constant 0 : i32
    return %c0_i32, %c0_i32_0 : i32, i32
  }
  func.func @transform_3(%arg0: i32) -> (i32, i32) {
    %c0_i32 = arith.constant 0 : i32
    %c0_i32_0 = arith.constant 0 : i32
    return %arg0, %c0_i32 : i32, i32
  }
}

</mosaic_0001>

<llo_original>
// kernel: tpu_custom_call.1
$region0: #{tpu_custom_call.1}
  #allocation0 [shape = 'u32[]', space=smem, size = 0x4, offset = 0x4, fixed_abs, tag = 'smem constant byte address 0x4 - core index']
  #allocation1 [shape = 'u32[144,128]{1,0:T(1,128)}', space=vmem, size = 0x12000, scoped, tag = 'internal scratch']
  #allocation2 [shape = 'f32[8,8,120]{2,1,0:T(8,128)}', space=vmem, size = 0x8000, scoped, tag = 'scratch operand']
  %s0 = inlined_call_operand.vmem [shape: f32[8,8,4], index: 0, kind: input, shape index: {}]
  %s1 = inlined_call_operand.vmem [shape: s32[8,1], index: 1, kind: input, shape index: {}]
  %s2 = inlined_call_operand.vmem [shape: f32[96,128], index: 2, kind: input, shape index: {}]
  %s3 = inlined_call_operand.hbm [shape: f32[8,20], index: 3, kind: output, shape index: {}]
  %s4 = sld [smem:[#allocation0]]
  $region22: #{tpu_custom_call.1} parent=0
    _
  %s6 = ssub.s32 1, %s4
  %s7 = scalar_select 0, %s6, %s4
  $region1: #{tpu_custom_call.1} parent=0
    #allocation3 [shape = 'u8[4096]{0}', space=vmem, size = 0x1000, scoped, tag = 'output window, operand 0, single buffered']
    #allocation4 [shape = 's32[1]{0}', space=sflag, size = 0x4, scoped, tag = 'scoped memory for tpu_custom_call.1']
    %8 = vsyncpa [#allocation4], 0
    // Predicated region
    $region2: #{tpu_custom_call.1} parent=1 // pred_check
      _
    $region3: #{tpu_custom_call.1} parent=1 // pred_check_branch
      %10 = sbr.rel (0) target = $region5
    $region4: #{tpu_custom_call.1} parent=1 // pred_region
      _
    $region5: #{tpu_custom_call.1} parent=1 // pred_fallthru
      _
    // Predicated region
    $region6: #{tpu_custom_call.1} parent=1 // pred_check
      _
    $region7: #{tpu_custom_call.1} parent=1 // pred_check_branch
      %12 = sbr.rel (0) target = $region9
    $region8: #{tpu_custom_call.1} parent=1 // pred_region
      _
    $region9: #{tpu_custom_call.1} parent=1 // pred_fallthru
      _
    // Predicated region
    $region10: #{tpu_custom_call.1} parent=1 // pred_check
      _
    $region11: #{tpu_custom_call.1} parent=1 // pred_check_branch
      %14 = sbr.rel (0) target = $region13
    $region12: #{tpu_custom_call.1} parent=1 // pred_region
      _
    $region13: #{tpu_custom_call.1} parent=1 // pred_fallthru
      _
    %v15 = vld [vmem:[%s2] sm:$0xf]
    %v16 = vld [vmem:[%s2 + $0x8] sm:$0xff]
    %v17 = vld [vmem:[%s2 + $0x10] sm:$0xff]
    %v18 = vld [vmem:[%s2 + $0x18] sm:$0xff]
    %v19 = vld [vmem:[%s2 + $0x20] sm:$0xff]
    %v20 = vld [vmem:[%s2 + $0x28] sm:$0xff]
    %v21 = vld [vmem:[%s2 + $0x30] sm:$0xff]
    %v22 = vld [vmem:[%s2 + $0x38] sm:$0xff]
    %v23 = vld [vmem:[%s2 + $0x40] sm:$0xff]
    %v24 = vld [vmem:[%s2 + $0x48] sm:$0xff]
    %v25 = vld [vmem:[%s2 + $0x50] sm:$0xff]
    %v26 = vld [vmem:[%s2 + $0x58] sm:$0x1]
    %v27 = vld [vmem:[%s2 + $0x59] sm:$0x1]
    %v28 = vld [vmem:[%s2 + $0x5a] sm:$0x1]
    %v29 = vld [vmem:[%s1] sm:$0xff]
    %v30 = vld [vmem:[%s0] sm:$0xff]
    %v31 = vld [vmem:[%s0 + $0x8] sm:$0xff]
    %v32 = vld [vmem:[%s0 + $0x10] sm:$0xff]
    %v33 = vld [vmem:[%s0 + $0x18] sm:$0xff]
    %v34 = vld [vmem:[%s0 + $0x20] sm:$0xff]
    %v35 = vld [vmem:[%s0 + $0x28] sm:$0xff]
    %v36 = vld [vmem:[%s0 + $0x30] sm:$0xff]
    %v37 = vld [vmem:[%s0 + $0x38] sm:$0xff]
    %v38 = vlaneseq
    %v39 = vshrl.u32 %v38, 7
    %v40 = vsub.s32 0, %v39
    %v41 = vrot.slane %v26, %v40
    %vm42 = vcmask 31744
    %v44 = vsel %vm42, %v30, 0
    %v47 = vsel %vm42, %v31, 0
    %v50 = vsel %vm42, %v32, 0
    %v53 = vsel %vm42, %v33, 0
    %v56 = vsel %vm42, %v34, 0
    %v59 = vsel %vm42, %v35, 0
    %v62 = vsel %vm42, %v36, 0
    %v65 = vsel %vm42, %v37, 0
    %vm67 = vcmask 1043456
    %v69 = vsel %vm67, %v15, 0
    %71 = vmatprep.subr.mxu0 0.0
    %72 = vmatpush1.msra.mxu0 0.0
    %73 = vmatprep.subr.mxu0 0.0
    %74 = vmatpush1.msra.mxu0 0.0
    %75 = vmatprep.subr.mxu0 0.0
    %76 = vmatpush1.msra.mxu0 0.0
    %77 = vmatprep.subr.mxu0 0.0
    %78 = vmatpush1.msra.mxu0 0.0
    %79 = vmatprep.subr.mxu0 0.0
    %80 = vmatpush1.msra.mxu0 0.0
    %81 = vmatprep.subr.mxu0 0.0
    %82 = vmatpush1.msra.mxu0 0.0
    %83 = vmatprep.subr.mxu0 0.0
    %84 = vmatpush1.msra.mxu0 0.0
    %85 = vmatprep.subr.mxu0 0.0
    %86 = vmatpush1.msra.mxu0 0.0
    %87 = vmatprep.subr.mxu0 0.0
    %88 = vmatpush1.msra.mxu0 0.0
    %89 = vmatprep.subr.mxu0 0.0
    %90 = vmatpush1.msra.mxu0 0.0
    %91 = vmatprep.subr.mxu0 0.0
    %92 = vmatpush1.msra.mxu0 0.0
    %93 = vmatprep.subr.mxu0 0.0
    %94 = vmatpush1.msra.mxu0 0.0
    %95 = vmatprep.subr.mxu0 0.0
    %96 = vmatpush1.msra.mxu0 0.0
    %97 = vmatprep.subr.mxu0 0.0
    %98 = vmatpush1.msra.mxu0 0.0
    %99 = vmatprep.subr.mxu0 0.0
    %100 = vmatpush1.msra.mxu0 0.0
    %101 = vmatprep.subr.mxu0 0.0
    %102 = vmatpush1.msra.mxu0 %v69
    %103 = vmatprep.subr.mxu0 0.0
    %104 = vmatpush2.msra.mxu0 0.0
    %105 = vmatprep.subr.mxu0 0.0
    %106 = vmatpush2.msra.mxu0 0.0
    %107 = vmatprep.subr.mxu0 0.0
    %108 = vmatpush2.msra.mxu0 0.0
    %109 = vmatprep.subr.mxu0 0.0
    %110 = vmatpush2.msra.mxu0 0.0
    %111 = vmatprep.subr.mxu0 0.0
    %112 = vmatpush2.msra.mxu0 0.0
    %113 = vmatprep.subr.mxu0 0.0
    %114 = vmatpush2.msra.mxu0 0.0
    %115 = vmatprep.subr.mxu0 0.0
    %116 = vmatpush2.msra.mxu0 0.0
    %117 = vmatprep.subr.mxu0 0.0
    %118 = vmatpush2.msra.mxu0 0.0
    %119 = vmatprep.subr.mxu0 0.0
    %120 = vmatpush2.msra.mxu0 0.0
    %121 = vmatprep.subr.mxu0 0.0
    %122 = vmatpush2.msra.mxu0 0.0
    %123 = vmatprep.subr.mxu0 0.0
    %124 = vmatpush2.msra.mxu0 0.0
    %125 = vmatprep.subr.mxu0 0.0
    %126 = vmatpush2.msra.mxu0 0.0
    %127 = vmatprep.subr.mxu0 0.0
    %128 = vmatpush2.msra.mxu0 0.0
    %129 = vmatprep.subr.mxu0 0.0
    %130 = vmatpush2.msra.mxu0 0.0
    %131 = vmatprep.subr.mxu0 0.0
    %132 = vmatpush2.msra.mxu0 0.0
    %133 = vmatprep.subr.mxu0 0.0
    %134 = vmatpush2.msra.mxu0 0.0
    %135 = vmatprep.mubr.f32.mxu0 0.0
    %136 = vmatmul.mubr.f32.gmra.mxu0 %v44
    %v137 = vpop.f32.mrf.mxu0
    %v138 = vadd.f32 %v41, %v137
    %v139 = vpop.f32.mrf.mxu0
    %140 = vmatprep.mubr.f32.mxu0 0.0
    %141 = vmatmul.mubr.f32.gmra.mxu0 %v47
    %v142 = vpop.f32.mrf.mxu0
    %v143 = vadd.f32 %v41, %v142
    %v144 = vpop.f32.mrf.mxu0
    %145 = vmatprep.mubr.f32.mxu0 0.0
    %146 = vmatmul.mubr.f32.gmra.mxu0 %v50
    %v147 = vpop.f32.mrf.mxu0
    %v148 = vadd.f32 %v41, %v147
    %v149 = vpop.f32.mrf.mxu0
    %150 = vmatprep.mubr.f32.mxu0 0.0
    %151 = vmatmul.mubr.f32.gmra.mxu0 %v53
    %v152 = vpop.f32.mrf.mxu0
    %v153 = vadd.f32 %v41, %v152
    %v154 = vpop.f32.mrf.mxu0
    %155 = vmatprep.mubr.f32.mxu0 0.0
    %156 = vmatmul.mubr.f32.gmra.mxu0 %v56
    %v157 = vpop.f32.mrf.mxu0
    %v158 = vadd.f32 %v41, %v157
    %v159 = vpop.f32.mrf.mxu0
    %160 = vmatprep.mubr.f32.mxu0 0.0
    %161 = vmatmul.mubr.f32.gmra.mxu0 %v59
    %v162 = vpop.f32.mrf.mxu0
    %v163 = vadd.f32 %v41, %v162
    %v164 = vpop.f32.mrf.mxu0
    %165 = vmatprep.mubr.f32.mxu0 0.0
    %166 = vmatmul.mubr.f32.gmra.mxu0 %v62
    %v167 = vpop.f32.mrf.mxu0
    %v168 = vadd.f32 %v41, %v167
    %v169 = vpop.f32.mrf.mxu0
    %170 = vmatprep.mubr.f32.mxu0 0.0
    %171 = vmatmul.mubr.f32.gmra.mxu0 %v65
    %v172 = vpop.f32.mrf.mxu0
    %v173 = vadd.f32 %v41, %v172
    %v174 = vpop.f32.mrf.mxu0
    %175 = vdwg.mxu0
    %vm176 = vcmask 982016
    %177 = vst.msk [vmem:[#allocation2] sm:$0xff] %vm176, %v138
    %178 = vst.msk [vmem:[#allocation2 + $0x8] sm:$0xff] %vm176, %v143
    %179 = vst.msk [vmem:[#allocation2 + $0x10] sm:$0xff] %vm176, %v148
    %180 = vst.msk [vmem:[#allocation2 + $0x18] sm:$0xff] %vm176, %v153
    %181 = vst.msk [vmem:[#allocation2 + $0x20] sm:$0xff] %vm176, %v158
    %182 = vst.msk [vmem:[#allocation2 + $0x28] sm:$0xff] %vm176, %v163
    %183 = vst.msk [vmem:[#allocation2 + $0x30] sm:$0xff] %vm176, %v168
    %184 = vst.msk [vmem:[#allocation2 + $0x38] sm:$0xff] %vm176, %v173
    %v185 = vlaneseq
    %v186 = vand.u32 %v185, 127
    %vm187 = vcmp.lt.s32.totalorder %v186, 20
    %vm188 = vcmp.ge.s32.totalorder %v186, 40
    %vm189 = vcmp.lt.s32.totalorder %v186, 60
    %vm190 = vmand %vm188, %vm189
    %vm191 = vmor %vm187, %vm190
    %vm192 = vcmp.ge.s32.totalorder %v186, 80
    %vm193 = vcmp.lt.s32.totalorder %v186, 100
    %vm194 = vmand %vm192, %vm193
    %vm195 = vmor %vm191, %vm194
    %196 = vset.pattern.permute.xlu0 0
    %197 = vperm.xlu0 %196, %v29
    %v198 = vpop.permute.xlu0 %197
    %v199 = vlaneseq
    %v200 = vshrl.u32 %v199, 7
    %v201 = vsub.s32 0, %v200
    %v202 = vrot.slane %v27, %v201
    %v203 = vsel %vm187, 0, 7
    %v204 = vsel %vm187, 1, 6
    %v205 = vsel %vm187, 2, 5
    %v206 = vsel %vm187, 3, 4
    %v207 = vsel %vm187, 4, 3
    %v208 = vsel %vm187, 5, 2
    %v209 = vsel %vm187, 6, 1
    %v210 = vsel %vm187, 7, 0
    %v211 = vld [vmem:[#allocation2] sm:$0xff]
    %s212 = scalar_lea.vmem [#allocation2], 56
    %v213 = vld [vmem:[%s212] sm:$0xff]
    %v214 = vsel %vm195, 1, 0
    %vm215 = vcmp.eq.s32.totalorder %v214, 1
    %v216 = vsel %vm215, %v211, %v213
    %vm217 = vcmask 326656
    %v219 = vsel %vm217, 0.0, 0
    %221 = vmatprep.subr.mxu0 0.0
    %222 = vmatpush1.msra.mxu0 0.0
    %223 = vmatprep.subr.mxu0 0.0
    %224 = vmatpush1.msra.mxu0 0.0
    %225 = vmatprep.subr.mxu0 0.0
    %226 = vmatpush1.msra.mxu0 0.0
    %227 = vmatprep.subr.mxu0 0.0
    %228 = vmatpush1.msra.mxu0 0.0
    %229 = vmatprep.subr.mxu0 0.0
    %230 = vmatpush1.msra.mxu0 0.0
    %231 = vmatprep.subr.mxu0 0.0
    %232 = vmatpush1.msra.mxu0 0.0
    %233 = vmatprep.subr.mxu0 0.0
    %234 = vmatpush1.msra.mxu0 0.0
    %235 = vmatprep.subr.mxu0 0.0
    %236 = vmatpush1.msra.mxu0 0.0
    %237 = vmatprep.subr.mxu0 0.0
    %238 = vmatpush1.msra.mxu0 0.0
    %239 = vmatprep.subr.mxu0 0.0
    %240 = vmatpush1.msra.mxu0 0.0
    %241 = vmatprep.subr.mxu0 0.0
    %242 = vmatpush1.msra.mxu0 0.0
    %243 = vmatprep.subr.mxu0 0.0
    %244 = vmatpush1.msra.mxu0 %v20
    %245 = vmatprep.subr.mxu0 0.0
    %246 = vmatpush1.msra.mxu0 %v19
    %247 = vmatprep.subr.mxu0 0.0
    %248 = vmatpush1.msra.mxu0 %v18
    %249 = vmatprep.subr.mxu0 0.0
    %250 = vmatpush1.msra.mxu0 %v17
    %251 = vmatprep.subr.mxu0 0.0
    %252 = vmatpush1.msra.mxu0 %v16
    %253 = vmatprep.subr.mxu0 0.0
    %254 = vmatpush2.msra.mxu0 0.0
    %255 = vmatprep.subr.mxu0 0.0
    %256 = vmatpush2.msra.mxu0 0.0
    %257 = vmatprep.subr.mxu0 0.0
    %258 = vmatpush2.msra.mxu0 0.0
    %259 = vmatprep.subr.mxu0 0.0
    %260 = vmatpush2.msra.mxu0 0.0
    %261 = vmatprep.subr.mxu0 0.0
    %262 = vmatpush2.msra.mxu0 0.0
    %263 = vmatprep.subr.mxu0 0.0
    %264 = vmatpush2.msra.mxu0 0.0
    %265 = vmatprep.subr.mxu0 0.0
    %266 = vmatpush2.msra.mxu0 0.0
    %267 = vmatprep.subr.mxu0 0.0
    %268 = vmatpush2.msra.mxu0 0.0
    %269 = vmatprep.subr.mxu0 0.0
    %270 = vmatpush2.msra.mxu0 0.0
    %271 = vmatprep.subr.mxu0 0.0
    %272 = vmatpush2.msra.mxu0 0.0
    %273 = vmatprep.subr.mxu0 0.0
    %274 = vmatpush2.msra.mxu0 0.0
    %275 = vmatprep.subr.mxu0 0.0
    %276 = vmatpush2.msra.mxu0 0.0
    %277 = vmatprep.subr.mxu0 0.0
    %278 = vmatpush2.msra.mxu0 0.0
    %279 = vmatprep.subr.mxu0 0.0
    %280 = vmatpush2.msra.mxu0 0.0
    %281 = vmatprep.subr.mxu0 0.0
    %282 = vmatpush2.msra.mxu0 0.0
    %283 = vmatprep.subr.mxu0 0.0
    %284 = vmatpush2.msra.mxu0 0.0
    %285 = vmatprep.mubr.f32.mxu0 0.0
    %286 = vmatmul.mubr.f32.gmra.mxu0 %v219
    %v287 = vpop.f32.mrf.mxu0
    %v288 = vadd.f32 0.0, %v287
    %v289 = vpop.f32.mrf.mxu0
    %290 = vdwg.mxu0
    %v291 = vadd.f32 %v216, %v288
    %v292 = vxor.u32 %v291, 2147483648
    %v293 = vmul.f32 %v292, 1.442695
    %v294 = vpow.pop %v293
    %v295 = vadd.f32 %v294, 1.0
    %v296 = vrcp.pop %v295
    %v297 = vmul.f32 1.0, %v296
    %299 = vrot.lane.b32.xlu0 %v202, 80
    %v300 = vpop.permute.xlu0 %299
    %v302 = vadd.f32 %v288, %v300
    %304 = vrot.lane.b32.xlu0 %v302, 48
    %v305 = vpop.permute.xlu0 %304
    %v307 = vmul.f32 %v297, %v305
    %309 = vrot.lane.b32.xlu0 %v307, 80
    %v310 = vpop.permute.xlu0 %309
    %v312 = vadd.f32 %v216, %v310
    %v313 = vtanh.pop %v312
    %v314 = vsub.f32 1.0, %v297
    %316 = vrot.lane.b32.xlu0 %v313, 88
    %v317 = vpop.permute.xlu0 %316
    %v319 = vmul.f32 %v314, %v317
    %v320 = vmul.f32 %v297, 0.0
    %v321 = vadd.f32 %v319, %v320
    %vm322 = vcmp.gt.s32.totalorder %v198, %v203
    %324 = vrot.lane.b32.xlu0 %v321, 88
    %v325 = vpop.permute.xlu0 %324
    %v327 = vsel %vm322, %v325, 0.0
    %s328 = scalar_lea.vmem [#allocation2], 8
    %v329 = vld [vmem:[%s328] sm:$0xff]
    %s330 = scalar_lea.vmem [#allocation2], 48
    %v331 = vld [vmem:[%s330] sm:$0xff]
    %v332 = vsel %vm215, %v329, %v331
    %v334 = vsel %vm217, %v327, 0
    %336 = vmatprep.subr.mxu0 0.0
    %337 = vmatpush1.msra.mxu0 0.0
    %338 = vmatprep.subr.mxu0 0.0
    %339 = vmatpush1.msra.mxu0 0.0
    %340 = vmatprep.subr.mxu0 0.0
    %341 = vmatpush1.msra.mxu0 0.0
    %342 = vmatprep.subr.mxu0 0.0
    %343 = vmatpush1.msra.mxu0 0.0
    %344 = vmatprep.subr.mxu0 0.0
    %345 = vmatpush1.msra.mxu0 0.0
    %346 = vmatprep.subr.mxu0 0.0
    %347 = vmatpush1.msra.mxu0 0.0
    %348 = vmatprep.subr.mxu0 0.0
    %349 = vmatpush1.msra.mxu0 0.0
    %350 = vmatprep.subr.mxu0 0.0
    %351 = vmatpush1.msra.mxu0 0.0
    %352 = vmatprep.subr.mxu0 0.0
    %353 = vmatpush1.msra.mxu0 0.0
    %354 = vmatprep.subr.mxu0 0.0
    %355 = vmatpush1.msra.mxu0 0.0
    %356 = vmatprep.subr.mxu0 0.0
    %357 = vmatpush1.msra.mxu0 0.0
    %358 = vmatprep.subr.mxu0 0.0
    %359 = vmatpush1.msra.mxu0 %v20
    %360 = vmatprep.subr.mxu0 0.0
    %361 = vmatpush1.msra.mxu0 %v19
    %362 = vmatprep.subr.mxu0 0.0
    %363 = vmatpush1.msra.mxu0 %v18
    %364 = vmatprep.subr.mxu0 0.0
    %365 = vmatpush1.msra.mxu0 %v17
    %366 = vmatprep.subr.mxu0 0.0
    %367 = vmatpush1.msra.mxu0 %v16
    %368 = vmatprep.subr.mxu0 0.0
    %369 = vmatpush2.msra.mxu0 0.0
    %370 = vmatprep.subr.mxu0 0.0
    %371 = vmatpush2.msra.mxu0 0.0
    %372 = vmatprep.subr.mxu0 0.0
    %373 = vmatpush2.msra.mxu0 0.0
    %374 = vmatprep.subr.mxu0 0.0
    %375 = vmatpush2.msra.mxu0 0.0
    %376 = vmatprep.subr.mxu0 0.0
    %377 = vmatpush2.msra.mxu0 0.0
    %378 = vmatprep.subr.mxu0 0.0
    %379 = vmatpush2.msra.mxu0 0.0
    %380 = vmatprep.subr.mxu0 0.0
    %381 = vmatpush2.msra.mxu0 0.0
    %382 = vmatprep.subr.mxu0 0.0
    %383 = vmatpush2.msra.mxu0 0.0
    %384 = vmatprep.subr.mxu0 0.0
    %385 = vmatpush2.msra.mxu0 0.0
    %386 = vmatprep.subr.mxu0 0.0
    %387 = vmatpush2.msra.mxu0 0.0
    %388 = vmatprep.subr.mxu0 0.0
    %389 = vmatpush2.msra.mxu0 0.0
    %390 = vmatprep.subr.mxu0 0.0
    %391 = vmatpush2.msra.mxu0 0.0
    %392 = vmatprep.subr.mxu0 0.0
    %393 = vmatpush2.msra.mxu0 0.0
    %394 = vmatprep.subr.mxu0 0.0
    %395 = vmatpush2.msra.mxu0 0.0
    %396 = vmatprep.subr.mxu0 0.0
    %397 = vmatpush2.msra.mxu0 0.0
    %398 = vmatprep.subr.mxu0 0.0
    %399 = vmatpush2.msra.mxu0 0.0
    %400 = vmatprep.mubr.f32.mxu0 0.0
    %401 = vmatmul.mubr.f32.gmra.mxu0 %v334
    %v402 = vpop.f32.mrf.mxu0
    %v403 = vadd.f32 0.0, %v402
    %v404 = vpop.f32.mrf.mxu0
    %405 = vdwg.mxu0
    %v406 = vadd.f32 %v332, %v403
    %v407 = vxor.u32 %v406, 2147483648
    %v408 = vmul.f32 %v407, 1.442695
    %v409 = vpow.pop %v408
    %v410 = vadd.f32 %v409, 1.0
    %v411 = vrcp.pop %v410
    %v412 = vmul.f32 1.0, %v411
    %v413 = vadd.f32 %v403, %v300
    %415 = vrot.lane.b32.xlu0 %v413, 48
    %v416 = vpop.permute.xlu0 %415
    %v418 = vmul.f32 %v412, %v416
    %420 = vrot.lane.b32.xlu0 %v418, 80
    %v421 = vpop.permute.xlu0 %420
    %v423 = vadd.f32 %v332, %v421
    %v424 = vtanh.pop %v423
    %v425 = vsub.f32 1.0, %v412
    %427 = vrot.lane.b32.xlu0 %v424, 88
    %v428 = vpop.permute.xlu0 %427
    %v430 = vmul.f32 %v425, %v428
    %431 = vrot.lane.b32.xlu0 %v327, 40
    %v432 = vpop.permute.xlu0 %431
    %v434 = vmul.f32 %v412, %v432
    %v435 = vadd.f32 %v430, %v434
    %vm436 = vcmp.gt.s32.totalorder %v198, %v204
    %438 = vrot.lane.b32.xlu0 %v435, 88
    %v439 = vpop.permute.xlu0 %438
    %v441 = vsel %vm436, %v439, %v327
    %s442 = scalar_lea.vmem [#allocation2], 16
    %v443 = vld [vmem:[%s442] sm:$0xff]
    %s444 = scalar_lea.vmem [#allocation2], 40
    %v445 = vld [vmem:[%s444] sm:$0xff]
    %v446 = vsel %vm215, %v443, %v445
    %v448 = vsel %vm217, %v441, 0
    %450 = vmatprep.subr.mxu0 0.0
    %451 = vmatpush1.msra.mxu0 0.0
    %452 = vmatprep.subr.mxu0 0.0
    %453 = vmatpush1.msra.mxu0 0.0
    %454 = vmatprep.subr.mxu0 0.0
    %455 = vmatpush1.msra.mxu0 0.0
    %456 = vmatprep.subr.mxu0 0.0
    %457 = vmatpush1.msra.mxu0 0.0
    %458 = vmatprep.subr.mxu0 0.0
    %459 = vmatpush1.msra.mxu0 0.0
    %460 = vmatprep.subr.mxu0 0.0
    %461 = vmatpush1.msra.mxu0 0.0
    %462 = vmatprep.subr.mxu0 0.0
    %463 = vmatpush1.msra.mxu0 0.0
    %464 = vmatprep.subr.mxu0 0.0
    %465 = vmatpush1.msra.mxu0 0.0
    %466 = vmatprep.subr.mxu0 0.0
    %467 = vmatpush1.msra.mxu0 0.0
    %468 = vmatprep.subr.mxu0 0.0
    %469 = vmatpush1.msra.mxu0 0.0
    %470 = vmatprep.subr.mxu0 0.0
    %471 = vmatpush1.msra.mxu0 0.0
    %472 = vmatprep.subr.mxu0 0.0
    %473 = vmatpush1.msra.mxu0 %v20
    %474 = vmatprep.subr.mxu0 0.0
    %475 = vmatpush1.msra.mxu0 %v19
    %476 = vmatprep.subr.mxu0 0.0
    %477 = vmatpush1.msra.mxu0 %v18
    %478 = vmatprep.subr.mxu0 0.0
    %479 = vmatpush1.msra.mxu0 %v17
    %480 = vmatprep.subr.mxu0 0.0
    %481 = vmatpush1.msra.mxu0 %v16
    %482 = vmatprep.subr.mxu0 0.0
    %483 = vmatpush2.msra.mxu0 0.0
    %484 = vmatprep.subr.mxu0 0.0
    %485 = vmatpush2.msra.mxu0 0.0
    %486 = vmatprep.subr.mxu0 0.0
    %487 = vmatpush2.msra.mxu0 0.0
    %488 = vmatprep.subr.mxu0 0.0
    %489 = vmatpush2.msra.mxu0 0.0
    %490 = vmatprep.subr.mxu0 0.0
    %491 = vmatpush2.msra.mxu0 0.0
    %492 = vmatprep.subr.mxu0 0.0
    %493 = vmatpush2.msra.mxu0 0.0
    %494 = vmatprep.subr.mxu0 0.0
    %495 = vmatpush2.msra.mxu0 0.0
    %496 = vmatprep.subr.mxu0 0.0
    %497 = vmatpush2.msra.mxu0 0.0
    %498 = vmatprep.subr.mxu0 0.0
    %499 = vmatpush2.msra.mxu0 0.0
    %500 = vmatprep.subr.mxu0 0.0
    %501 = vmatpush2.msra.mxu0 0.0
    %502 = vmatprep.subr.mxu0 0.0
    %503 = vmatpush2.msra.mxu0 0.0
    %504 = vmatprep.subr.mxu0 0.0
    %505 = vmatpush2.msra.mxu0 0.0
    %506 = vmatprep.subr.mxu0 0.0
    %507 = vmatpush2.msra.mxu0 0.0
    %508 = vmatprep.subr.mxu0 0.0
    %509 = vmatpush2.msra.mxu0 0.0
    %510 = vmatprep.subr.mxu0 0.0
    %511 = vmatpush2.msra.mxu0 0.0
    %512 = vmatprep.subr.mxu0 0.0
    %513 = vmatpush2.msra.mxu0 0.0
    %514 = vmatprep.mubr.f32.mxu0 0.0
    %515 = vmatmul.mubr.f32.gmra.mxu0 %v448
    %v516 = vpop.f32.mrf.mxu0
    %v517 = vadd.f32 0.0, %v516
    %v518 = vpop.f32.mrf.mxu0
    %519 = vdwg.mxu0
    %v520 = vadd.f32 %v446, %v517
    %v521 = vxor.u32 %v520, 2147483648
    %v522 = vmul.f32 %v521, 1.442695
    %v523 = vpow.pop %v522
    %v524 = vadd.f32 %v523, 1.0
    %v525 = vrcp.pop %v524
    %v526 = vmul.f32 1.0, %v525
    %v527 = vadd.f32 %v517, %v300
    %529 = vrot.lane.b32.xlu0 %v527, 48
    %v530 = vpop.permute.xlu0 %529
    %v532 = vmul.f32 %v526, %v530
    %534 = vrot.lane.b32.xlu0 %v532, 80
    %v535 = vpop.permute.xlu0 %534
    %v537 = vadd.f32 %v446, %v535
    %v538 = vtanh.pop %v537
    %v539 = vsub.f32 1.0, %v526
    %541 = vrot.lane.b32.xlu0 %v538, 88
    %v542 = vpop.permute.xlu0 %541
    %v544 = vmul.f32 %v539, %v542
    %545 = vrot.lane.b32.xlu0 %v441, 40
    %v546 = vpop.permute.xlu0 %545
    %v548 = vmul.f32 %v526, %v546
    %v549 = vadd.f32 %v544, %v548
    %vm550 = vcmp.gt.s32.totalorder %v198, %v205
    %552 = vrot.lane.b32.xlu0 %v549, 88
    %v553 = vpop.permute.xlu0 %552
    %v555 = vsel %vm550, %v553, %v441
    %s556 = scalar_lea.vmem [#allocation2], 24
    %v557 = vld [vmem:[%s556] sm:$0xff]
    %s558 = scalar_lea.vmem [#allocation2], 32
    %v559 = vld [vmem:[%s558] sm:$0xff]
    %v560 = vsel %vm215, %v557, %v559
    %v562 = vsel %vm217, %v555, 0
    %564 = vmatprep.subr.mxu0 0.0
    %565 = vmatpush1.msra.mxu0 0.0
    %566 = vmatprep.subr.mxu0 0.0
    %567 = vmatpush1.msra.mxu0 0.0
    %568 = vmatprep.subr.mxu0 0.0
    %569 = vmatpush1.msra.mxu0 0.0
    %570 = vmatprep.subr.mxu0 0.0
    %571 = vmatpush1.msra.mxu0 0.0
    %572 = vmatprep.subr.mxu0 0.0
    %573 = vmatpush1.msra.mxu0 0.0
    %574 = vmatprep.subr.mxu0 0.0
    %575 = vmatpush1.msra.mxu0 0.0
    %576 = vmatprep.subr.mxu0 0.0
    %577 = vmatpush1.msra.mxu0 0.0
    %578 = vmatprep.subr.mxu0 0.0
    %579 = vmatpush1.msra.mxu0 0.0
    %580 = vmatprep.subr.mxu0 0.0
    %581 = vmatpush1.msra.mxu0 0.0
    %582 = vmatprep.subr.mxu0 0.0
    %583 = vmatpush1.msra.mxu0 0.0
    %584 = vmatprep.subr.mxu0 0.0
    %585 = vmatpush1.msra.mxu0 0.0
    %586 = vmatprep.subr.mxu0 0.0
    %587 = vmatpush1.msra.mxu0 %v20
    %588 = vmatprep.subr.mxu0 0.0
    %589 = vmatpush1.msra.mxu0 %v19
    %590 = vmatprep.subr.mxu0 0.0
    %591 = vmatpush1.msra.mxu0 %v18
    %592 = vmatprep.subr.mxu0 0.0
    %593 = vmatpush1.msra.mxu0 %v17
    %594 = vmatprep.subr.mxu0 0.0
    %595 = vmatpush1.msra.mxu0 %v16
    %596 = vmatprep.subr.mxu0 0.0
    %597 = vmatpush2.msra.mxu0 0.0
    %598 = vmatprep.subr.mxu0 0.0
    %599 = vmatpush2.msra.mxu0 0.0
    %600 = vmatprep.subr.mxu0 0.0
    %601 = vmatpush2.msra.mxu0 0.0
    %602 = vmatprep.subr.mxu0 0.0
    %603 = vmatpush2.msra.mxu0 0.0
    %604 = vmatprep.subr.mxu0 0.0
    %605 = vmatpush2.msra.mxu0 0.0
    %606 = vmatprep.subr.mxu0 0.0
    %607 = vmatpush2.msra.mxu0 0.0
    %608 = vmatprep.subr.mxu0 0.0
    %609 = vmatpush2.msra.mxu0 0.0
    %610 = vmatprep.subr.mxu0 0.0
    %611 = vmatpush2.msra.mxu0 0.0
    %612 = vmatprep.subr.mxu0 0.0
    %613 = vmatpush2.msra.mxu0 0.0
    %614 = vmatprep.subr.mxu0 0.0
    %615 = vmatpush2.msra.mxu0 0.0
    %616 = vmatprep.subr.mxu0 0.0
    %617 = vmatpush2.msra.mxu0 0.0
    %618 = vmatprep.subr.mxu0 0.0
    %619 = vmatpush2.msra.mxu0 0.0
    %620 = vmatprep.subr.mxu0 0.0
    %621 = vmatpush2.msra.mxu0 0.0
    %622 = vmatprep.subr.mxu0 0.0
    %623 = vmatpush2.msra.mxu0 0.0
    %624 = vmatprep.subr.mxu0 0.0
    %625 = vmatpush2.msra.mxu0 0.0
    %626 = vmatprep.subr.mxu0 0.0
    %627 = vmatpush2.msra.mxu0 0.0
    %628 = vmatprep.mubr.f32.mxu0 0.0
    %629 = vmatmul.mubr.f32.gmra.mxu0 %v562
    %v630 = vpop.f32.mrf.mxu0
    %v631 = vadd.f32 0.0, %v630
    %v632 = vpop.f32.mrf.mxu0
    %633 = vdwg.mxu0
    %v634 = vadd.f32 %v560, %v631
    %v635 = vxor.u32 %v634, 2147483648
    %v636 = vmul.f32 %v635, 1.442695
    %v637 = vpow.pop %v636
    %v638 = vadd.f32 %v637, 1.0
    %v639 = vrcp.pop %v638
    %v640 = vmul.f32 1.0, %v639
    %v641 = vadd.f32 %v631, %v300
    %643 = vrot.lane.b32.xlu0 %v641, 48
    %v644 = vpop.permute.xlu0 %643
    %v646 = vmul.f32 %v640, %v644
    %648 = vrot.lane.b32.xlu0 %v646, 80
    %v649 = vpop.permute.xlu0 %648
    %v651 = vadd.f32 %v560, %v649
    %v652 = vtanh.pop %v651
    %v653 = vsub.f32 1.0, %v640
    %655 = vrot.lane.b32.xlu0 %v652, 88
    %v656 = vpop.permute.xlu0 %655
    %v658 = vmul.f32 %v653, %v656
    %659 = vrot.lane.b32.xlu0 %v555, 40
    %v660 = vpop.permute.xlu0 %659
    %v662 = vmul.f32 %v640, %v660
    %v663 = vadd.f32 %v658, %v662
    %vm664 = vcmp.gt.s32.totalorder %v198, %v206
    %666 = vrot.lane.b32.xlu0 %v663, 88
    %v667 = vpop.permute.xlu0 %666
    %v669 = vsel %vm664, %v667, %v555
    %v670 = vsel %vm215, %v559, %v557
    %v672 = vsel %vm217, %v669, 0
    %674 = vmatprep.subr.mxu0 0.0
    %675 = vmatpush1.msra.mxu0 0.0
    %676 = vmatprep.subr.mxu0 0.0
    %677 = vmatpush1.msra.mxu0 0.0
    %678 = vmatprep.subr.mxu0 0.0
    %679 = vmatpush1.msra.mxu0 0.0
    %680 = vmatprep.subr.mxu0 0.0
    %681 = vmatpush1.msra.mxu0 0.0
    %682 = vmatprep.subr.mxu0 0.0
    %683 = vmatpush1.msra.mxu0 0.0
    %684 = vmatprep.subr.mxu0 0.0
    %685 = vmatpush1.msra.mxu0 0.0
    %686 = vmatprep.subr.mxu0 0.0
    %687 = vmatpush1.msra.mxu0 0.0
    %688 = vmatprep.subr.mxu0 0.0
    %689 = vmatpush1.msra.mxu0 0.0
    %690 = vmatprep.subr.mxu0 0.0
    %691 = vmatpush1.msra.mxu0 0.0
    %692 = vmatprep.subr.mxu0 0.0
    %693 = vmatpush1.msra.mxu0 0.0
    %694 = vmatprep.subr.mxu0 0.0
    %695 = vmatpush1.msra.mxu0 0.0
    %696 = vmatprep.subr.mxu0 0.0
    %697 = vmatpush1.msra.mxu0 %v20
    %698 = vmatprep.subr.mxu0 0.0
    %699 = vmatpush1.msra.mxu0 %v19
    %700 = vmatprep.subr.mxu0 0.0
    %701 = vmatpush1.msra.mxu0 %v18
    %702 = vmatprep.subr.mxu0 0.0
    %703 = vmatpush1.msra.mxu0 %v17
    %704 = vmatprep.subr.mxu0 0.0
    %705 = vmatpush1.msra.mxu0 %v16
    %706 = vmatprep.subr.mxu0 0.0
    %707 = vmatpush2.msra.mxu0 0.0
    %708 = vmatprep.subr.mxu0 0.0
    %709 = vmatpush2.msra.mxu0 0.0
    %710 = vmatprep.subr.mxu0 0.0
    %711 = vmatpush2.msra.mxu0 0.0
    %712 = vmatprep.subr.mxu0 0.0
    %713 = vmatpush2.msra.mxu0 0.0
    %714 = vmatprep.subr.mxu0 0.0
    %715 = vmatpush2.msra.mxu0 0.0
    %716 = vmatprep.subr.mxu0 0.0
    %717 = vmatpush2.msra.mxu0 0.0
    %718 = vmatprep.subr.mxu0 0.0
    %719 = vmatpush2.msra.mxu0 0.0
    %720 = vmatprep.subr.mxu0 0.0
    %721 = vmatpush2.msra.mxu0 0.0
    %722 = vmatprep.subr.mxu0 0.0
    %723 = vmatpush2.msra.mxu0 0.0
    %724 = vmatprep.subr.mxu0 0.0
    %725 = vmatpush2.msra.mxu0 0.0
    %726 = vmatprep.subr.mxu0 0.0
    %727 = vmatpush2.msra.mxu0 0.0
    %728 = vmatprep.subr.mxu0 0.0
    %729 = vmatpush2.msra.mxu0 0.0
    %730 = vmatprep.subr.mxu0 0.0
    %731 = vmatpush2.msra.mxu0 0.0
    %732 = vmatprep.subr.mxu0 0.0
    %733 = vmatpush2.msra.mxu0 0.0
    %734 = vmatprep.subr.mxu0 0.0
    %735 = vmatpush2.msra.mxu0 0.0
    %736 = vmatprep.subr.mxu0 0.0
    %737 = vmatpush2.msra.mxu0 0.0
    %738 = vmatprep.mubr.f32.mxu0 0.0
    %739 = vmatmul.mubr.f32.gmra.mxu0 %v672
    %v740 = vpop.f32.mrf.mxu0
    %v741 = vadd.f32 0.0, %v740
    %v742 = vpop.f32.mrf.mxu0
    %743 = vdwg.mxu0
    %v744 = vadd.f32 %v670, %v741
    %v745 = vxor.u32 %v744, 2147483648
    %v746 = vmul.f32 %v745, 1.442695
    %v747 = vpow.pop %v746
    %v748 = vadd.f32 %v747, 1.0
    %v749 = vrcp.pop %v748
    %v750 = vmul.f32 1.0, %v749
    %v751 = vadd.f32 %v741, %v300
    %753 = vrot.lane.b32.xlu0 %v751, 48
    %v754 = vpop.permute.xlu0 %753
    %v756 = vmul.f32 %v750, %v754
    %758 = vrot.lane.b32.xlu0 %v756, 80
    %v759 = vpop.permute.xlu0 %758
    %v761 = vadd.f32 %v670, %v759
    %v762 = vtanh.pop %v761
    %v763 = vsub.f32 1.0, %v750
    %765 = vrot.lane.b32.xlu0 %v762, 88
    %v766 = vpop.permute.xlu0 %765
    %v768 = vmul.f32 %v763, %v766
    %769 = vrot.lane.b32.xlu0 %v669, 40
    %v770 = vpop.permute.xlu0 %769
    %v772 = vmul.f32 %v750, %v770
    %v773 = vadd.f32 %v768, %v772
    %vm774 = vcmp.gt.s32.totalorder %v198, %v207
    %776 = vrot.lane.b32.xlu0 %v773, 88
    %v777 = vpop.permute.xlu0 %776
    %v779 = vsel %vm774, %v777, %v669
    %v780 = vsel %vm215, %v445, %v443
    %v782 = vsel %vm217, %v779, 0
    %784 = vmatprep.subr.mxu0 0.0
    %785 = vmatpush1.msra.mxu0 0.0
    %786 = vmatprep.subr.mxu0 0.0
    %787 = vmatpush1.msra.mxu0 0.0
    %788 = vmatprep.subr.mxu0 0.0
    %789 = vmatpush1.msra.mxu0 0.0
    %790 = vmatprep.subr.mxu0 0.0
    %791 = vmatpush1.msra.mxu0 0.0
    %792 = vmatprep.subr.mxu0 0.0
    %793 = vmatpush1.msra.mxu0 0.0
    %794 = vmatprep.subr.mxu0 0.0
    %795 = vmatpush1.msra.mxu0 0.0
    %796 = vmatprep.subr.mxu0 0.0
    %797 = vmatpush1.msra.mxu0 0.0
    %798 = vmatprep.subr.mxu0 0.0
    %799 = vmatpush1.msra.mxu0 0.0
    %800 = vmatprep.subr.mxu0 0.0
    %801 = vmatpush1.msra.mxu0 0.0
    %802 = vmatprep.subr.mxu0 0.0
    %803 = vmatpush1.msra.mxu0 0.0
    %804 = vmatprep.subr.mxu0 0.0
    %805 = vmatpush1.msra.mxu0 0.0
    %806 = vmatprep.subr.mxu0 0.0
    %807 = vmatpush1.msra.mxu0 %v20
    %808 = vmatprep.subr.mxu0 0.0
    %809 = vmatpush1.msra.mxu0 %v19
    %810 = vmatprep.subr.mxu0 0.0
    %811 = vmatpush1.msra.mxu0 %v18
    %812 = vmatprep.subr.mxu0 0.0
    %813 = vmatpush1.msra.mxu0 %v17
    %814 = vmatprep.subr.mxu0 0.0
    %815 = vmatpush1.msra.mxu0 %v16
    %816 = vmatprep.subr.mxu0 0.0
    %817 = vmatpush2.msra.mxu0 0.0
    %818 = vmatprep.subr.mxu0 0.0
    %819 = vmatpush2.msra.mxu0 0.0
    %820 = vmatprep.subr.mxu0 0.0
    %821 = vmatpush2.msra.mxu0 0.0
    %822 = vmatprep.subr.mxu0 0.0
    %823 = vmatpush2.msra.mxu0 0.0
    %824 = vmatprep.subr.mxu0 0.0
    %825 = vmatpush2.msra.mxu0 0.0
    %826 = vmatprep.subr.mxu0 0.0
    %827 = vmatpush2.msra.mxu0 0.0
    %828 = vmatprep.subr.mxu0 0.0
    %829 = vmatpush2.msra.mxu0 0.0
    %830 = vmatprep.subr.mxu0 0.0
    %831 = vmatpush2.msra.mxu0 0.0
    %832 = vmatprep.subr.mxu0 0.0
    %833 = vmatpush2.msra.mxu0 0.0
    %834 = vmatprep.subr.mxu0 0.0
    %835 = vmatpush2.msra.mxu0 0.0
    %836 = vmatprep.subr.mxu0 0.0
    %837 = vmatpush2.msra.mxu0 0.0
    %838 = vmatprep.subr.mxu0 0.0
    %839 = vmatpush2.msra.mxu0 0.0
    %840 = vmatprep.subr.mxu0 0.0
    %841 = vmatpush2.msra.mxu0 0.0
    %842 = vmatprep.subr.mxu0 0.0
    %843 = vmatpush2.msra.mxu0 0.0
    %844 = vmatprep.subr.mxu0 0.0
    %845 = vmatpush2.msra.mxu0 0.0
    %846 = vmatprep.subr.mxu0 0.0
    %847 = vmatpush2.msra.mxu0 0.0
    %848 = vmatprep.mubr.f32.mxu0 0.0
    %849 = vmatmul.mubr.f32.gmra.mxu0 %v782
    %v850 = vpop.f32.mrf.mxu0
    %v851 = vadd.f32 0.0, %v850
    %v852 = vpop.f32.mrf.mxu0
    %853 = vdwg.mxu0
    %v854 = vadd.f32 %v780, %v851
    %v855 = vxor.u32 %v854, 2147483648
    %v856 = vmul.f32 %v855, 1.442695
    %v857 = vpow.pop %v856
    %v858 = vadd.f32 %v857, 1.0
    %v859 = vrcp.pop %v858
    %v860 = vmul.f32 1.0, %v859
    %v861 = vadd.f32 %v851, %v300
    %863 = vrot.lane.b32.xlu0 %v861, 48
    %v864 = vpop.permute.xlu0 %863
    %v866 = vmul.f32 %v860, %v864
    %868 = vrot.lane.b32.xlu0 %v866, 80
    %v869 = vpop.permute.xlu0 %868
    %v871 = vadd.f32 %v780, %v869
    %v872 = vtanh.pop %v871
    %v873 = vsub.f32 1.0, %v860
    %875 = vrot.lane.b32.xlu0 %v872, 88
    %v876 = vpop.permute.xlu0 %875
    %v878 = vmul.f32 %v873, %v876
    %879 = vrot.lane.b32.xlu0 %v779, 40
    %v880 = vpop.permute.xlu0 %879
    %v882 = vmul.f32 %v860, %v880
    %v883 = vadd.f32 %v878, %v882
    %vm884 = vcmp.gt.s32.totalorder %v198, %v208
    %886 = vrot.lane.b32.xlu0 %v883, 88
    %v887 = vpop.permute.xlu0 %886
    %v889 = vsel %vm884, %v887, %v779
    %v890 = vsel %vm215, %v331, %v329
    %v892 = vsel %vm217, %v889, 0
    %894 = vmatprep.subr.mxu0 0.0
    %895 = vmatpush1.msra.mxu0 0.0
    %896 = vmatprep.subr.mxu0 0.0
    %897 = vmatpush1.msra.mxu0 0.0
    %898 = vmatprep.subr.mxu0 0.0
    %899 = vmatpush1.msra.mxu0 0.0
    %900 = vmatprep.subr.mxu0 0.0
    %901 = vmatpush1.msra.mxu0 0.0
    %902 = vmatprep.subr.mxu0 0.0
    %903 = vmatpush1.msra.mxu0 0.0
    %904 = vmatprep.subr.mxu0 0.0
    %905 = vmatpush1.msra.mxu0 0.0
    %906 = vmatprep.subr.mxu0 0.0
    %907 = vmatpush1.msra.mxu0 0.0
    %908 = vmatprep.subr.mxu0 0.0
    %909 = vmatpush1.msra.mxu0 0.0
    %910 = vmatprep.subr.mxu0 0.0
    %911 = vmatpush1.msra.mxu0 0.0
    %912 = vmatprep.subr.mxu0 0.0
    %913 = vmatpush1.msra.mxu0 0.0
    %914 = vmatprep.subr.mxu0 0.0
    %915 = vmatpush1.msra.mxu0 0.0
    %916 = vmatprep.subr.mxu0 0.0
    %917 = vmatpush1.msra.mxu0 %v20
    %918 = vmatprep.subr.mxu0 0.0
    %919 = vmatpush1.msra.mxu0 %v19
    %920 = vmatprep.subr.mxu0 0.0
    %921 = vmatpush1.msra.mxu0 %v18
    %922 = vmatprep.subr.mxu0 0.0
    %923 = vmatpush1.msra.mxu0 %v17
    %924 = vmatprep.subr.mxu0 0.0
    %925 = vmatpush1.msra.mxu0 %v16
    %926 = vmatprep.subr.mxu0 0.0
    %927 = vmatpush2.msra.mxu0 0.0
    %928 = vmatprep.subr.mxu0 0.0
    %929 = vmatpush2.msra.mxu0 0.0
    %930 = vmatprep.subr.mxu0 0.0
    %931 = vmatpush2.msra.mxu0 0.0
    %932 = vmatprep.subr.mxu0 0.0
    %933 = vmatpush2.msra.mxu0 0.0
    %934 = vmatprep.subr.mxu0 0.0
    %935 = vmatpush2.msra.mxu0 0.0
    %936 = vmatprep.subr.mxu0 0.0
    %937 = vmatpush2.msra.mxu0 0.0
    %938 = vmatprep.subr.mxu0 0.0
    %939 = vmatpush2.msra.mxu0 0.0
    %940 = vmatprep.subr.mxu0 0.0
    %941 = vmatpush2.msra.mxu0 0.0
    %942 = vmatprep.subr.mxu0 0.0
    %943 = vmatpush2.msra.mxu0 0.0
    %944 = vmatprep.subr.mxu0 0.0
    %945 = vmatpush2.msra.mxu0 0.0
    %946 = vmatprep.subr.mxu0 0.0
    %947 = vmatpush2.msra.mxu0 0.0
    %948 = vmatprep.subr.mxu0 0.0
    %949 = vmatpush2.msra.mxu0 0.0
    %950 = vmatprep.subr.mxu0 0.0
    %951 = vmatpush2.msra.mxu0 0.0
    %952 = vmatprep.subr.mxu0 0.0
    %953 = vmatpush2.msra.mxu0 0.0
    %954 = vmatprep.subr.mxu0 0.0
    %955 = vmatpush2.msra.mxu0 0.0
    %956 = vmatprep.subr.mxu0 0.0
    %957 = vmatpush2.msra.mxu0 0.0
    %958 = vmatprep.mubr.f32.mxu0 0.0
    %959 = vmatmul.mubr.f32.gmra.mxu0 %v892
    %v960 = vpop.f32.mrf.mxu0
    %v961 = vadd.f32 0.0, %v960
    %v962 = vpop.f32.mrf.mxu0
    %963 = vdwg.mxu0
    %v964 = vadd.f32 %v890, %v961
    %v965 = vxor.u32 %v964, 2147483648
    %v966 = vmul.f32 %v965, 1.442695
    %v967 = vpow.pop %v966
    %v968 = vadd.f32 %v967, 1.0
    %v969 = vrcp.pop %v968
    %v970 = vmul.f32 1.0, %v969
    %v971 = vadd.f32 %v961, %v300
    %973 = vrot.lane.b32.xlu0 %v971, 48
    %v974 = vpop.permute.xlu0 %973
    %v976 = vmul.f32 %v970, %v974
    %978 = vrot.lane.b32.xlu0 %v976, 80
    %v979 = vpop.permute.xlu0 %978
    %v981 = vadd.f32 %v890, %v979
    %v982 = vtanh.pop %v981
    %v983 = vsub.f32 1.0, %v970
    %985 = vrot.lane.b32.xlu0 %v982, 88
    %v986 = vpop.permute.xlu0 %985
    %v988 = vmul.f32 %v983, %v986
    %989 = vrot.lane.b32.xlu0 %v889, 40
    %v990 = vpop.permute.xlu0 %989
    %v992 = vmul.f32 %v970, %v990
    %v993 = vadd.f32 %v988, %v992
    %vm994 = vcmp.gt.s32.totalorder %v198, %v209
    %996 = vrot.lane.b32.xlu0 %v993, 88
    %v997 = vpop.permute.xlu0 %996
    %v999 = vsel %vm994, %v997, %v889
    %v1000 = vsel %vm215, %v213, %v211
    %v1002 = vsel %vm217, %v999, 0
    %1004 = vmatprep.subr.mxu0 0.0
    %1005 = vmatpush1.msra.mxu0 0.0
    %1006 = vmatprep.subr.mxu0 0.0
    %1007 = vmatpush1.msra.mxu0 0.0
    %1008 = vmatprep.subr.mxu0 0.0
    %1009 = vmatpush1.msra.mxu0 0.0
    %1010 = vmatprep.subr.mxu0 0.0
    %1011 = vmatpush1.msra.mxu0 0.0
    %1012 = vmatprep.subr.mxu0 0.0
    %1013 = vmatpush1.msra.mxu0 0.0
    %1014 = vmatprep.subr.mxu0 0.0
    %1015 = vmatpush1.msra.mxu0 0.0
    %1016 = vmatprep.subr.mxu0 0.0
    %1017 = vmatpush1.msra.mxu0 0.0
    %1018 = vmatprep.subr.mxu0 0.0
    %1019 = vmatpush1.msra.mxu0 0.0
    %1020 = vmatprep.subr.mxu0 0.0
    %1021 = vmatpush1.msra.mxu0 0.0
    %1022 = vmatprep.subr.mxu0 0.0
    %1023 = vmatpush1.msra.mxu0 0.0
    %1024 = vmatprep.subr.mxu0 0.0
    %1025 = vmatpush1.msra.mxu0 0.0
    %1026 = vmatprep.subr.mxu0 0.0
    %1027 = vmatpush1.msra.mxu0 %v20
    %1028 = vmatprep.subr.mxu0 0.0
    %1029 = vmatpush1.msra.mxu0 %v19
    %1030 = vmatprep.subr.mxu0 0.0
    %1031 = vmatpush1.msra.mxu0 %v18
    %1032 = vmatprep.subr.mxu0 0.0
    %1033 = vmatpush1.msra.mxu0 %v17
    %1034 = vmatprep.subr.mxu0 0.0
    %1035 = vmatpush1.msra.mxu0 %v16
    %1036 = vmatprep.subr.mxu0 0.0
    %1037 = vmatpush2.msra.mxu0 0.0
    %1038 = vmatprep.subr.mxu0 0.0
    %1039 = vmatpush2.msra.mxu0 0.0
    %1040 = vmatprep.subr.mxu0 0.0
    %1041 = vmatpush2.msra.mxu0 0.0
    %1042 = vmatprep.subr.mxu0 0.0
    %1043 = vmatpush2.msra.mxu0 0.0
    %1044 = vmatprep.subr.mxu0 0.0
    %1045 = vmatpush2.msra.mxu0 0.0
    %1046 = vmatprep.subr.mxu0 0.0
    %1047 = vmatpush2.msra.mxu0 0.0
    %1048 = vmatprep.subr.mxu0 0.0
    %1049 = vmatpush2.msra.mxu0 0.0
    %1050 = vmatprep.subr.mxu0 0.0
    %1051 = vmatpush2.msra.mxu0 0.0
    %1052 = vmatprep.subr.mxu0 0.0
    %1053 = vmatpush2.msra.mxu0 0.0
    %1054 = vmatprep.subr.mxu0 0.0
    %1055 = vmatpush2.msra.mxu0 0.0
    %1056 = vmatprep.subr.mxu0 0.0
    %1057 = vmatpush2.msra.mxu0 0.0
    %1058 = vmatprep.subr.mxu0 0.0
    %1059 = vmatpush2.msra.mxu0 0.0
    %1060 = vmatprep.subr.mxu0 0.0
    %1061 = vmatpush2.msra.mxu0 0.0
    %1062 = vmatprep.subr.mxu0 0.0
    %1063 = vmatpush2.msra.mxu0 0.0
    %1064 = vmatprep.subr.mxu0 0.0
    %1065 = vmatpush2.msra.mxu0 0.0
    %1066 = vmatprep.subr.mxu0 0.0
    %1067 = vmatpush2.msra.mxu0 0.0
    %1068 = vmatprep.mubr.f32.mxu0 0.0
    %1069 = vmatmul.mubr.f32.gmra.mxu0 %v1002
    %v1070 = vpop.f32.mrf.mxu0
    %v1071 = vadd.f32 0.0, %v1070
    %v1072 = vpop.f32.mrf.mxu0
    %1073 = vdwg.mxu0
    %v1074 = vadd.f32 %v1000, %v1071
    %v1075 = vxor.u32 %v1074, 2147483648
    %v1076 = vmul.f32 %v1075, 1.442695
    %v1077 = vpow.pop %v1076
    %v1078 = vadd.f32 %v1077, 1.0
    %v1079 = vrcp.pop %v1078
    %v1080 = vmul.f32 1.0, %v1079
    %v1081 = vadd.f32 %v1071, %v300
    %1083 = vrot.lane.b32.xlu0 %v1081, 48
    %v1084 = vpop.permute.xlu0 %1083
    %v1086 = vmul.f32 %v1080, %v1084
    %1088 = vrot.lane.b32.xlu0 %v1086, 80
    %v1089 = vpop.permute.xlu0 %1088
    %v1091 = vadd.f32 %v1000, %v1089
    %v1092 = vtanh.pop %v1091
    %v1093 = vsub.f32 1.0, %v1080
    %1095 = vrot.lane.b32.xlu0 %v1092, 88
    %v1096 = vpop.permute.xlu0 %1095
    %v1098 = vmul.f32 %v1093, %v1096
    %1099 = vrot.lane.b32.xlu0 %v999, 40
    %v1100 = vpop.permute.xlu0 %1099
    %v1102 = vmul.f32 %v1080, %v1100
    %v1103 = vadd.f32 %v1098, %v1102
    %vm1104 = vcmp.gt.s32.totalorder %v198, %v210
    %1106 = vrot.lane.b32.xlu0 %v1103, 88
    %v1107 = vpop.permute.xlu0 %1106
    %v1109 = vsel %vm1104, %v1107, %v999
    %v1110 = vlaneseq
    %v1111 = vshrl.u32 %v1110, 7
    %v1112 = vsub.s32 0, %v1111
    %v1113 = vrot.slane %v28, %v1112
    %v1115 = vsel %vm217, %v1109, 0
    %1117 = vmatprep.subr.mxu0 0.0
    %1118 = vmatpush1.msra.mxu0 0.0
    %1119 = vmatprep.subr.mxu0 0.0
    %1120 = vmatpush1.msra.mxu0 0.0
    %1121 = vmatprep.subr.mxu0 0.0
    %1122 = vmatpush1.msra.mxu0 0.0
    %1123 = vmatprep.subr.mxu0 0.0
    %1124 = vmatpush1.msra.mxu0 0.0
    %1125 = vmatprep.subr.mxu0 0.0
    %1126 = vmatpush1.msra.mxu0 0.0
    %1127 = vmatprep.subr.mxu0 0.0
    %1128 = vmatpush1.msra.mxu0 0.0
    %1129 = vmatprep.subr.mxu0 0.0
    %1130 = vmatpush1.msra.mxu0 0.0
    %1131 = vmatprep.subr.mxu0 0.0
    %1132 = vmatpush1.msra.mxu0 0.0
    %1133 = vmatprep.subr.mxu0 0.0
    %1134 = vmatpush1.msra.mxu0 0.0
    %1135 = vmatprep.subr.mxu0 0.0
    %1136 = vmatpush1.msra.mxu0 0.0
    %1137 = vmatprep.subr.mxu0 0.0
    %1138 = vmatpush1.msra.mxu0 0.0
    %1139 = vmatprep.subr.mxu0 0.0
    %1140 = vmatpush1.msra.mxu0 %v25
    %1141 = vmatprep.subr.mxu0 0.0
    %1142 = vmatpush1.msra.mxu0 %v24
    %1143 = vmatprep.subr.mxu0 0.0
    %1144 = vmatpush1.msra.mxu0 %v23
    %1145 = vmatprep.subr.mxu0 0.0
    %1146 = vmatpush1.msra.mxu0 %v22
    %1147 = vmatprep.subr.mxu0 0.0
    %1148 = vmatpush1.msra.mxu0 %v21
    %1149 = vmatprep.subr.mxu0 0.0
    %1150 = vmatpush2.msra.mxu0 0.0
    %1151 = vmatprep.subr.mxu0 0.0
    %1152 = vmatpush2.msra.mxu0 0.0
    %1153 = vmatprep.subr.mxu0 0.0
    %1154 = vmatpush2.msra.mxu0 0.0
    %1155 = vmatprep.subr.mxu0 0.0
    %1156 = vmatpush2.msra.mxu0 0.0
    %1157 = vmatprep.subr.mxu0 0.0
    %1158 = vmatpush2.msra.mxu0 0.0
    %1159 = vmatprep.subr.mxu0 0.0
    %1160 = vmatpush2.msra.mxu0 0.0
    %1161 = vmatprep.subr.mxu0 0.0
    %1162 = vmatpush2.msra.mxu0 0.0
    %1163 = vmatprep.subr.mxu0 0.0
    %1164 = vmatpush2.msra.mxu0 0.0
    %1165 = vmatprep.subr.mxu0 0.0
    %1166 = vmatpush2.msra.mxu0 0.0
    %1167 = vmatprep.subr.mxu0 0.0
    %1168 = vmatpush2.msra.mxu0 0.0
    %1169 = vmatprep.subr.mxu0 0.0
    %1170 = vmatpush2.msra.mxu0 0.0
    %1171 = vmatprep.subr.mxu0 0.0
    %1172 = vmatpush2.msra.mxu0 0.0
    %1173 = vmatprep.subr.mxu0 0.0
    %1174 = vmatpush2.msra.mxu0 0.0
    %1175 = vmatprep.subr.mxu0 0.0
    %1176 = vmatpush2.msra.mxu0 0.0
    %1177 = vmatprep.subr.mxu0 0.0
    %1178 = vmatpush2.msra.mxu0 0.0
    %1179 = vmatprep.subr.mxu0 0.0
    %1180 = vmatpush2.msra.mxu0 0.0
    %1181 = vmatprep.mubr.f32.mxu0 0.0
    %1182 = vmatmul.mubr.f32.gmra.mxu0 %v1115
    %v1183 = vpop.f32.mrf.mxu0
    %v1184 = vadd.f32 %v1113, %v1183
    %v1185 = vpop.f32.mrf.mxu0
    %1186 = vdwg.mxu0
    %vm1187 = vcmask 162816
    %1188 = vst.msk [vmem:[#allocation3] sm:$0xff] %vm1187, %v1184
    // Predicated region
    $region14: #{tpu_custom_call.1} parent=1 // pred_check
      _
    $region15: #{tpu_custom_call.1} parent=1 // pred_check_branch
      %1190 = sbr.rel (0) target = $region17
    $region16: #{tpu_custom_call.1} parent=1 // pred_region
      %s1192 = ssub.s32 128, 128
      %1193 = vsyncadd [#allocation4], %s1192
      %s1195 = sshll.u32 [#allocation3], 4
      %s1196 = int_to_ptr.vmem [resolvable:$true] %s1195
      %1198 = dma.vmem_to_hbm [thread:$0]  %s1196, 128, %s3, [#allocation4]
    $region17: #{tpu_custom_call.1} parent=1 // pred_fallthru
      _
    // Predicated region
    $region18: #{tpu_custom_call.1} parent=1 // pred_check
      _
    $region19: #{tpu_custom_call.1} parent=1 // pred_check_branch
      %1200 = sbr.rel (0) target = $region21
    $region20: #{tpu_custom_call.1} parent=1 // pred_region
      %1201 = dma.done [#allocation4], 128
    $region21: #{tpu_custom_call.1} parent=1 // pred_fallthru
      _
    %1202 = vsyncpa [#allocation4], 1

</llo_original>
